<compile_context>
chip_gen: v7x
topology: tpu7x:2x2x1
jax: 0.10.0
libtpu: 0.0.40
codegen_flags: <defaults>
</compile_context>

<pallas_src>
import functools
import math

import jax
import jax.numpy as jnp
import numpy as np
from jax.experimental import pallas as pl
from jax.experimental.pallas import tpu as pltpu


def mha_kernel(k_ref, q_ref, v_ref, wk_ref, wq_ref, wv_ref, wo_ref, bo_ref, o_ref,
               *, num_heads, approx_recip):
    """One grid step processes `bb` batch elements.

    Shapes seen by the kernel:
      k_ref/v_ref: (bb, Nk, E)    q_ref: (bb, Nq, E)
      wk_ref/wq_ref/wv_ref: (E, E)   -- pre-transposed; W_q already scaled by 1/sqrt(hs)
      wo_ref: (E, value_dim)         -- pre-transposed head_combine weight
      bo_ref: (1, value_dim) f32
      o_ref:  (bb, Nq, value_dim) f32
    """
    bb, Nk, E = k_ref.shape
    Nq = q_ref.shape[1]
    H = num_heads
    hs = E // H
    cdt = wk_ref.dtype  # compute dtype for MXU matmuls (bf16 default, f32 optional)

    wk = wk_ref[...]
    wq = wq_ref[...]          # 1/sqrt(hs) folded in by the wrapper
    wv = wv_ref[...]
    wo = wo_ref[...]
    bo = bo_ref[...]          # (1, value_dim), f32

    for i in range(bb):       # static unroll over the batch elements in this block
        K = k_ref[i]          # (Nk, E)
        Q = q_ref[i]          # (Nq, E)
        V = v_ref[i]          # (Nk, E)

        # Full-width projections: one transpose-free (N, E) @ (E, E) MXU matmul each.
        kp = jnp.dot(K, wk, preferred_element_type=jnp.float32).astype(cdt)   # (Nk, E)
        qp = jnp.dot(Q, wq, preferred_element_type=jnp.float32).astype(cdt)   # (Nq, E)
        vp = jnp.dot(V, wv, preferred_element_type=jnp.float32).astype(cdt)   # (Nk, E)

        head_ctx = []
        for h in range(H):    # static unroll over heads; heads are static lane slices
            lo = h * hs
            qh = qp[:, lo:lo + hs]          # (Nq, hs)
            kh = kp[:, lo:lo + hs]          # (Nk, hs)
            vh = vp[:, lo:lo + hs]          # (Nk, hs)

            # logits = (Q Wq^T / sqrt(hs)) (K Wk^T)^T  -- trans_b matmul, f32 accumulate.
            logits = jax.lax.dot_general(
                qh, kh, (((1,), (1,)), ((), ())),
                preferred_element_type=jnp.float32)                     # (Nq, Nk)

            # Softmax statistics in f32.
            m = jnp.max(logits, axis=-1, keepdims=True)
            e = jnp.exp(logits - m)
            s = jnp.sum(e, axis=-1, keepdims=True)                      # (Nq, 1)

            # Unnormalized P V, then flash-style post-PV normalization over (Nq, hs)
            # elements instead of (Nq, Nk).  EUP reciprocal on the bf16 path.
            ctx_h = jnp.dot(e.astype(cdt), vh,
                            preferred_element_type=jnp.float32)         # (Nq, hs) f32
            ctx_h = ctx_h * pl.reciprocal(s, approx=approx_recip)
            head_ctx.append(ctx_h.astype(cdt))

        # Concatenate heads along lanes -> (Nq, E), matching _concat_head_outputs order.
        ctx = head_ctx[0] if H == 1 else jnp.concatenate(head_ctx, axis=-1)

        # Fused head_combine: one (Nq, E) @ (E, value_dim) matmul with full depth E + bias.
        out_i = jnp.dot(ctx, wo, preferred_element_type=jnp.float32) + bo
        o_ref[i] = out_i.astype(o_ref.dtype)


def multi_head_attention(keys, queries, values, wk, wq, wv, wo, bo, *, num_heads,
                         compute_dtype=jnp.bfloat16, grid_steps=None,
                         approx_reciprocal=None):
    """keys/values: (B, Nk, E); queries: (B, Nq, E). Returns (B, Nq, value_dim) float32.

    Weights follow the PyTorch nn.Linear convention (w is (out_features, in_features),
    y = x @ W.T + b).  All layout fix-ups (transpose, scale fold, dtype cast) happen once
    here, outside the kernel.

    grid_steps: number of (parallel) grid steps the batch is split over.  Default keeps 2
    steps when possible (dual-TensorCore v7x); pass 1 on single-TC v5e/v6e to fold the whole
    batch into one block and avoid per-step pipeline overhead.
    """
    B, Nk, E = keys.shape
    Nq = queries.shape[1]
    value_dim = wo.shape[0]
    assert E % num_heads == 0, "embedding_dim must be divisible by num_heads"
    hs = E // num_heads
    scale = 1.0 / math.sqrt(hs)

    if grid_steps is None:
        grid_steps = 2 if (B >= 2 and B % 2 == 0) else 1
    assert B % grid_steps == 0, "batch must be divisible by grid_steps"
    bb = B // grid_steps

    if approx_reciprocal is None:
        # Exact reciprocal for the f32 validation path; EUP approx for bf16 inference.
        approx_reciprocal = (compute_dtype == jnp.bfloat16)

    wk_t = wk.T.astype(compute_dtype)              # (E, E)
    wq_t = (wq.T * scale).astype(compute_dtype)    # (E, E), 1/sqrt(hs) folded in
    wv_t = wv.T.astype(compute_dtype)              # (E, E)
    wo_t = wo.T.astype(compute_dtype)              # (E, value_dim)
    bo_2 = bo.astype(jnp.float32).reshape(1, value_dim)

    keys_c = keys.astype(compute_dtype)
    queries_c = queries.astype(compute_dtype)
    values_c = values.astype(compute_dtype)

    kernel = functools.partial(mha_kernel, num_heads=num_heads,
                               approx_recip=approx_reciprocal)

    out = pl.pallas_call(
        kernel,
        out_shape=jax.ShapeDtypeStruct((B, Nq, value_dim), jnp.float32),
        grid=(grid_steps,),
        in_specs=[
            pl.BlockSpec((bb, Nk, E), lambda b: (b, 0, 0)),     # keys
            pl.BlockSpec((bb, Nq, E), lambda b: (b, 0, 0)),     # queries
            pl.BlockSpec((bb, Nk, E), lambda b: (b, 0, 0)),     # values
            pl.BlockSpec((E, E), lambda b: (0, 0)),             # W_k^T
            pl.BlockSpec((E, E), lambda b: (0, 0)),             # W_q^T (pre-scaled)
            pl.BlockSpec((E, E), lambda b: (0, 0)),             # W_v^T
            pl.BlockSpec((E, value_dim), lambda b: (0, 0)),     # W_o^T
            pl.BlockSpec((1, value_dim), lambda b: (0, 0)),     # b_o
        ],
        out_specs=pl.BlockSpec((bb, Nq, value_dim), lambda b: (b, 0, 0)),
        compiler_params=pltpu.CompilerParams(dimension_semantics=("parallel",)),
    )(keys_c, queries_c, values_c, wk_t, wq_t, wv_t, wo_t, bo_2)
    return out


def _xavier_normal(key, out_features, in_features):
    std = math.sqrt(2.0 / (in_features + out_features))
    return std * jax.random.normal(key, (out_features, in_features), dtype=jnp.float32)


def _reference_mha(keys, queries, values, wk, wq, wv, wo, bo, num_heads):
    """Pure-JAX f32 mirror of the PyTorch forward, for correctness checking."""
    B, _, E = keys.shape
    hs = E // num_heads
    k = keys @ wk.T
    q = queries @ wq.T
    v = values @ wv.T

    def split(x):
        b, n, _ = x.shape
        return x.reshape(b, n, num_heads, hs).transpose(2, 0, 1, 3)  # (H, B, N, hs)

    kh, qh, vh = split(k), split(q), split(v)
    logits = jnp.einsum("hbqd,hbkd->hbqk", qh, kh) / np.sqrt(hs)
    w = jax.nn.softmax(logits, axis=-1)
    o = jnp.einsum("hbqk,hbkd->hbqd", w, vh)          # (H, B, Nq, hs)
    o = o.transpose(1, 2, 0, 3).reshape(B, -1, E)     # (B, Nq, E) matches _concat_head_outputs
    return o @ wo.T + bo


if __name__ == "__main__":
    # Small, deterministic problem matching the module's (num_functions, n, dim) convention.
    B, Nk, Nq = 2, 12, 8
    embedding_dim = 32
    value_dim = 16
    num_heads = 4

    root = jax.random.PRNGKey(0)
    k_keys, k_queries, k_values, k_wk, k_wq, k_wv, k_wo = jax.random.split(root, 7)

    keys = jax.random.normal(k_keys, (B, Nk, embedding_dim), dtype=jnp.float32)
    queries = jax.random.normal(k_queries, (B, Nq, embedding_dim), dtype=jnp.float32)
    values = jax.random.normal(k_values, (B, Nk, embedding_dim), dtype=jnp.float32)

    # Parameters mimicking the module's __init__: xavier_normal weights, zero bias on
    # head_combine, no bias on the K/Q/V transforms.
    wk = _xavier_normal(k_wk, embedding_dim, embedding_dim)
    wq = _xavier_normal(k_wq, embedding_dim, embedding_dim)
    wv = _xavier_normal(k_wv, embedding_dim, embedding_dim)
    wo = _xavier_normal(k_wo, value_dim, embedding_dim)
    bo = jnp.zeros((value_dim,), dtype=jnp.float32)

    # f32 compute, exact reciprocal, whole batch folded into one grid step (the preferred
    # single-TensorCore v5e/v6e configuration; also exercises the bb > 1 batch-blocked path).
    out_f32 = multi_head_attention(keys, queries, values, wk, wq, wv, wo, bo,
                                   num_heads=num_heads, compute_dtype=jnp.float32,
                                   grid_steps=1)
    # bf16 compute, default grid (2 parallel steps -> both v7x TensorCores get work).
    out_bf16 = multi_head_attention(keys, queries, values, wk, wq, wv, wo, bo,
                                    num_heads=num_heads)
    out_f32, out_bf16 = jax.block_until_ready((out_f32, out_bf16))

    ref = _reference_mha(keys, queries, values, wk, wq, wv, wo, bo, num_heads)
    np.testing.assert_allclose(np.asarray(out_f32), np.asarray(ref), rtol=1e-2, atol=1e-2)
    np.testing.assert_allclose(np.asarray(out_bf16), np.asarray(ref), rtol=5e-2, atol=5e-2)

    print("KERNEL_OK")
</pallas_src>

<mosaic_0001>
module attributes {stable_mosaic.version = 11 : i64} {
  func.func @mha_kernel(%arg0: i32, %arg1: memref<2x12x32xf32, #tpu.memory_space<vmem>>, %arg2: memref<2x8x32xf32, #tpu.memory_space<vmem>>, %arg3: memref<2x12x32xf32, #tpu.memory_space<vmem>>, %arg4: memref<32x32xf32, #tpu.memory_space<vmem>>, %arg5: memref<32x32xf32, #tpu.memory_space<vmem>>, %arg6: memref<32x32xf32, #tpu.memory_space<vmem>>, %arg7: memref<32x16xf32, #tpu.memory_space<vmem>>, %arg8: memref<1x16xf32, #tpu.memory_space<vmem>>, %arg9: memref<2x8x16xf32, #tpu.memory_space<vmem>>) attributes {dimension_semantics = [#tpu.dimension_semantics<parallel>], iteration_bounds = array<i64: 1>, scalar_prefetch = 0 : i64, scratch_operands = 0 : i64, tpu.core_type = #tpu.core_type<tc>, window_params = [{transform_indices = @transform_0, window_bounds = array<i64: 2, 12, 32>}, {transform_indices = @transform_1, window_bounds = array<i64: 2, 8, 32>}, {transform_indices = @transform_2, window_bounds = array<i64: 2, 12, 32>}, {pipeline_mode = #tpu.pipeline_mode<synchronous>, transform_indices = @transform_3, window_bounds = array<i64: 32, 32>}, {pipeline_mode = #tpu.pipeline_mode<synchronous>, transform_indices = @transform_4, window_bounds = array<i64: 32, 32>}, {pipeline_mode = #tpu.pipeline_mode<synchronous>, transform_indices = @transform_5, window_bounds = array<i64: 32, 32>}, {pipeline_mode = #tpu.pipeline_mode<synchronous>, transform_indices = @transform_6, window_bounds = array<i64: 32, 16>}, {pipeline_mode = #tpu.pipeline_mode<synchronous>, transform_indices = @transform_7, window_bounds = array<i64: 1, 16>}, {transform_indices = @transform_8, window_bounds = array<i64: 2, 8, 16>}]} {
    %c0 = arith.constant 0 : index
    %c0_0 = arith.constant 0 : index
    %0 = vector.load %arg4[%c0, %c0_0] : memref<32x32xf32, #tpu.memory_space<vmem>>, vector<32x32xf32>
    %c0_1 = arith.constant 0 : index
    %c0_2 = arith.constant 0 : index
    %1 = vector.load %arg5[%c0_1, %c0_2] : memref<32x32xf32, #tpu.memory_space<vmem>>, vector<32x32xf32>
    %c0_3 = arith.constant 0 : index
    %c0_4 = arith.constant 0 : index
    %2 = vector.load %arg6[%c0_3, %c0_4] : memref<32x32xf32, #tpu.memory_space<vmem>>, vector<32x32xf32>
    %c0_5 = arith.constant 0 : index
    %c0_6 = arith.constant 0 : index
    %3 = vector.load %arg7[%c0_5, %c0_6] : memref<32x16xf32, #tpu.memory_space<vmem>>, vector<32x16xf32>
    %c0_7 = arith.constant 0 : index
    %c0_8 = arith.constant 0 : index
    %4 = vector.load %arg8[%c0_7, %c0_8] : memref<1x16xf32, #tpu.memory_space<vmem>>, vector<1x16xf32>
    %c0_9 = arith.constant 0 : index
    %c0_10 = arith.constant 0 : index
    %c0_11 = arith.constant 0 : index
    %5 = vector.load %arg1[%c0_9, %c0_10, %c0_11] : memref<2x12x32xf32, #tpu.memory_space<vmem>>, vector<1x12x32xf32>
    %6 = vector.shape_cast %5 : vector<1x12x32xf32> to vector<12x32xf32>
    %c0_12 = arith.constant 0 : index
    %c0_13 = arith.constant 0 : index
    %c0_14 = arith.constant 0 : index
    %7 = vector.load %arg2[%c0_12, %c0_13, %c0_14] : memref<2x8x32xf32, #tpu.memory_space<vmem>>, vector<1x8x32xf32>
    %8 = vector.shape_cast %7 : vector<1x8x32xf32> to vector<8x32xf32>
    %c0_15 = arith.constant 0 : index
    %c0_16 = arith.constant 0 : index
    %c0_17 = arith.constant 0 : index
    %9 = vector.load %arg3[%c0_15, %c0_16, %c0_17] : memref<2x12x32xf32, #tpu.memory_space<vmem>>, vector<1x12x32xf32>
    %10 = vector.shape_cast %9 : vector<1x12x32xf32> to vector<12x32xf32>
    %cst = arith.constant dense<0.000000e+00> : vector<12x32xf32>
    %11 = tpu.matmul %6, %0, %cst {dimension_numbers = #tpu.dot_dimension_numbers<[1], [0], [0], [1], [0, 0, 1, 1], [], []>} : vector<12x32xf32>, vector<32x32xf32>, vector<12x32xf32> -> vector<12x32xf32>
    %cst_18 = arith.constant dense<0.000000e+00> : vector<8x32xf32>
    %12 = tpu.matmul %8, %1, %cst_18 {dimension_numbers = #tpu.dot_dimension_numbers<[1], [0], [0], [1], [0, 0, 1, 1], [], []>} : vector<8x32xf32>, vector<32x32xf32>, vector<8x32xf32> -> vector<8x32xf32>
    %cst_19 = arith.constant dense<0.000000e+00> : vector<12x32xf32>
    %13 = tpu.matmul %10, %2, %cst_19 {dimension_numbers = #tpu.dot_dimension_numbers<[1], [0], [0], [1], [0, 0, 1, 1], [], []>} : vector<12x32xf32>, vector<32x32xf32>, vector<12x32xf32> -> vector<12x32xf32>
    %14 = vector.extract_strided_slice %12 {offsets = [0, 0], sizes = [8, 8], strides = [1, 1]} : vector<8x32xf32> to vector<8x8xf32>
    %15 = vector.extract_strided_slice %11 {offsets = [0, 0], sizes = [12, 8], strides = [1, 1]} : vector<12x32xf32> to vector<12x8xf32>
    %16 = vector.extract_strided_slice %13 {offsets = [0, 0], sizes = [12, 8], strides = [1, 1]} : vector<12x32xf32> to vector<12x8xf32>
    %cst_20 = arith.constant dense<0.000000e+00> : vector<8x12xf32>
    %17 = tpu.matmul %14, %15, %cst_20 {dimension_numbers = #tpu.dot_dimension_numbers<[1], [1], [0], [0], [0, 0, 1, 0], [], []>} : vector<8x8xf32>, vector<12x8xf32>, vector<8x12xf32> -> vector<8x12xf32>
    %cst_21 = arith.constant dense<0xFF800000> : vector<8xf32>
    %18 = vector.multi_reduction <maximumf>, %17, %cst_21 [1] : vector<8x12xf32> to vector<8xf32>
    %19 = vector.shape_cast %18 : vector<8xf32> to vector<8x1xf32>
    %20 = vector.broadcast %19 : vector<8x1xf32> to vector<8x12xf32>
    %21 = arith.subf %17, %20 : vector<8x12xf32>
    %22 = math.exp %21 : vector<8x12xf32>
    %cst_22 = arith.constant dense<0.000000e+00> : vector<8xf32>
    %23 = vector.multi_reduction <add>, %22, %cst_22 [1] : vector<8x12xf32> to vector<8xf32>
    %24 = vector.shape_cast %23 : vector<8xf32> to vector<8x1xf32>
    %cst_23 = arith.constant dense<0.000000e+00> : vector<8x8xf32>
    %25 = tpu.matmul %22, %16, %cst_23 {dimension_numbers = #tpu.dot_dimension_numbers<[1], [0], [0], [1], [0, 0, 1, 1], [], []>} : vector<8x12xf32>, vector<12x8xf32>, vector<8x8xf32> -> vector<8x8xf32>
    %26 = tpu.reciprocal %24 : vector<8x1xf32> -> vector<8x1xf32>
    %27 = vector.broadcast %26 : vector<8x1xf32> to vector<8x8xf32>
    %28 = arith.mulf %25, %27 : vector<8x8xf32>
    %29 = vector.extract_strided_slice %12 {offsets = [0, 8], sizes = [8, 8], strides = [1, 1]} : vector<8x32xf32> to vector<8x8xf32>
    %30 = vector.extract_strided_slice %11 {offsets = [0, 8], sizes = [12, 8], strides = [1, 1]} : vector<12x32xf32> to vector<12x8xf32>
    %31 = vector.extract_strided_slice %13 {offsets = [0, 8], sizes = [12, 8], strides = [1, 1]} : vector<12x32xf32> to vector<12x8xf32>
    %cst_24 = arith.constant dense<0.000000e+00> : vector<8x12xf32>
    %32 = tpu.matmul %29, %30, %cst_24 {dimension_numbers = #tpu.dot_dimension_numbers<[1], [1], [0], [0], [0, 0, 1, 0], [], []>} : vector<8x8xf32>, vector<12x8xf32>, vector<8x12xf32> -> vector<8x12xf32>
    %cst_25 = arith.constant dense<0xFF800000> : vector<8xf32>
    %33 = vector.multi_reduction <maximumf>, %32, %cst_25 [1] : vector<8x12xf32> to vector<8xf32>
    %34 = vector.shape_cast %33 : vector<8xf32> to vector<8x1xf32>
    %35 = vector.broadcast %34 : vector<8x1xf32> to vector<8x12xf32>
    %36 = arith.subf %32, %35 : vector<8x12xf32>
    %37 = math.exp %36 : vector<8x12xf32>
    %cst_26 = arith.constant dense<0.000000e+00> : vector<8xf32>
    %38 = vector.multi_reduction <add>, %37, %cst_26 [1] : vector<8x12xf32> to vector<8xf32>
    %39 = vector.shape_cast %38 : vector<8xf32> to vector<8x1xf32>
    %cst_27 = arith.constant dense<0.000000e+00> : vector<8x8xf32>
    %40 = tpu.matmul %37, %31, %cst_27 {dimension_numbers = #tpu.dot_dimension_numbers<[1], [0], [0], [1], [0, 0, 1, 1], [], []>} : vector<8x12xf32>, vector<12x8xf32>, vector<8x8xf32> -> vector<8x8xf32>
    %41 = tpu.reciprocal %39 : vector<8x1xf32> -> vector<8x1xf32>
    %42 = vector.broadcast %41 : vector<8x1xf32> to vector<8x8xf32>
    %43 = arith.mulf %40, %42 : vector<8x8xf32>
    %44 = vector.extract_strided_slice %12 {offsets = [0, 16], sizes = [8, 8], strides = [1, 1]} : vector<8x32xf32> to vector<8x8xf32>
    %45 = vector.extract_strided_slice %11 {offsets = [0, 16], sizes = [12, 8], strides = [1, 1]} : vector<12x32xf32> to vector<12x8xf32>
    %46 = vector.extract_strided_slice %13 {offsets = [0, 16], sizes = [12, 8], strides = [1, 1]} : vector<12x32xf32> to vector<12x8xf32>
    %cst_28 = arith.constant dense<0.000000e+00> : vector<8x12xf32>
    %47 = tpu.matmul %44, %45, %cst_28 {dimension_numbers = #tpu.dot_dimension_numbers<[1], [1], [0], [0], [0, 0, 1, 0], [], []>} : vector<8x8xf32>, vector<12x8xf32>, vector<8x12xf32> -> vector<8x12xf32>
    %cst_29 = arith.constant dense<0xFF800000> : vector<8xf32>
    %48 = vector.multi_reduction <maximumf>, %47, %cst_29 [1] : vector<8x12xf32> to vector<8xf32>
    %49 = vector.shape_cast %48 : vector<8xf32> to vector<8x1xf32>
    %50 = vector.broadcast %49 : vector<8x1xf32> to vector<8x12xf32>
    %51 = arith.subf %47, %50 : vector<8x12xf32>
    %52 = math.exp %51 : vector<8x12xf32>
    %cst_30 = arith.constant dense<0.000000e+00> : vector<8xf32>
    %53 = vector.multi_reduction <add>, %52, %cst_30 [1] : vector<8x12xf32> to vector<8xf32>
    %54 = vector.shape_cast %53 : vector<8xf32> to vector<8x1xf32>
    %cst_31 = arith.constant dense<0.000000e+00> : vector<8x8xf32>
    %55 = tpu.matmul %52, %46, %cst_31 {dimension_numbers = #tpu.dot_dimension_numbers<[1], [0], [0], [1], [0, 0, 1, 1], [], []>} : vector<8x12xf32>, vector<12x8xf32>, vector<8x8xf32> -> vector<8x8xf32>
    %56 = tpu.reciprocal %54 : vector<8x1xf32> -> vector<8x1xf32>
    %57 = vector.broadcast %56 : vector<8x1xf32> to vector<8x8xf32>
    %58 = arith.mulf %55, %57 : vector<8x8xf32>
    %59 = vector.extract_strided_slice %12 {offsets = [0, 24], sizes = [8, 8], strides = [1, 1]} : vector<8x32xf32> to vector<8x8xf32>
    %60 = vector.extract_strided_slice %11 {offsets = [0, 24], sizes = [12, 8], strides = [1, 1]} : vector<12x32xf32> to vector<12x8xf32>
    %61 = vector.extract_strided_slice %13 {offsets = [0, 24], sizes = [12, 8], strides = [1, 1]} : vector<12x32xf32> to vector<12x8xf32>
    %cst_32 = arith.constant dense<0.000000e+00> : vector<8x12xf32>
    %62 = tpu.matmul %59, %60, %cst_32 {dimension_numbers = #tpu.dot_dimension_numbers<[1], [1], [0], [0], [0, 0, 1, 0], [], []>} : vector<8x8xf32>, vector<12x8xf32>, vector<8x12xf32> -> vector<8x12xf32>
    %cst_33 = arith.constant dense<0xFF800000> : vector<8xf32>
    %63 = vector.multi_reduction <maximumf>, %62, %cst_33 [1] : vector<8x12xf32> to vector<8xf32>
    %64 = vector.shape_cast %63 : vector<8xf32> to vector<8x1xf32>
    %65 = vector.broadcast %64 : vector<8x1xf32> to vector<8x12xf32>
    %66 = arith.subf %62, %65 : vector<8x12xf32>
    %67 = math.exp %66 : vector<8x12xf32>
    %cst_34 = arith.constant dense<0.000000e+00> : vector<8xf32>
    %68 = vector.multi_reduction <add>, %67, %cst_34 [1] : vector<8x12xf32> to vector<8xf32>
    %69 = vector.shape_cast %68 : vector<8xf32> to vector<8x1xf32>
    %cst_35 = arith.constant dense<0.000000e+00> : vector<8x8xf32>
    %70 = tpu.matmul %67, %61, %cst_35 {dimension_numbers = #tpu.dot_dimension_numbers<[1], [0], [0], [1], [0, 0, 1, 1], [], []>} : vector<8x12xf32>, vector<12x8xf32>, vector<8x8xf32> -> vector<8x8xf32>
    %71 = tpu.reciprocal %69 : vector<8x1xf32> -> vector<8x1xf32>
    %72 = vector.broadcast %71 : vector<8x1xf32> to vector<8x8xf32>
    %73 = arith.mulf %70, %72 : vector<8x8xf32>
    %74 = tpu.concatenate %28, %43, %58, %73 in 1 : vector<8x8xf32>, vector<8x8xf32>, vector<8x8xf32>, vector<8x8xf32> -> vector<8x32xf32>
    %cst_36 = arith.constant dense<0.000000e+00> : vector<8x16xf32>
    %75 = tpu.matmul %74, %3, %cst_36 {dimension_numbers = #tpu.dot_dimension_numbers<[1], [0], [0], [1], [0, 0, 1, 1], [], []>} : vector<8x32xf32>, vector<32x16xf32>, vector<8x16xf32> -> vector<8x16xf32>
    %76 = vector.broadcast %4 : vector<1x16xf32> to vector<8x16xf32>
    %77 = arith.addf %75, %76 : vector<8x16xf32>
    %c0_37 = arith.constant 0 : index
    %c0_38 = arith.constant 0 : index
    %c0_39 = arith.constant 0 : index
    %78 = vector.load %arg9[%c0_37, %c0_38, %c0_39] : memref<2x8x16xf32, #tpu.memory_space<vmem>>, vector<1x8x16xf32>
    %79 = vector.shape_cast %78 : vector<1x8x16xf32> to vector<8x16xf32>
    %80 = vector.shape_cast %77 : vector<8x16xf32> to vector<1x8x16xf32>
    tpu.vector_store %arg9[%c0_37, %c0_38, %c0_39], %80 {strides = array<i32>} : memref<2x8x16xf32, #tpu.memory_space<vmem>>, vector<1x8x16xf32>,
    %c1 = arith.constant 1 : index
    %c0_40 = arith.constant 0 : index
    %c0_41 = arith.constant 0 : index
    %81 = vector.load %arg1[%c1, %c0_40, %c0_41] : memref<2x12x32xf32, #tpu.memory_space<vmem>>, vector<1x12x32xf32>
    %82 = vector.shape_cast %81 : vector<1x12x32xf32> to vector<12x32xf32>
    %c1_42 = arith.constant 1 : index
    %c0_43 = arith.constant 0 : index
    %c0_44 = arith.constant 0 : index
    %83 = vector.load %arg2[%c1_42, %c0_43, %c0_44] : memref<2x8x32xf32, #tpu.memory_space<vmem>>, vector<1x8x32xf32>
    %84 = vector.shape_cast %83 : vector<1x8x32xf32> to vector<8x32xf32>
    %c1_45 = arith.constant 1 : index
    %c0_46 = arith.constant 0 : index
    %c0_47 = arith.constant 0 : index
    %85 = vector.load %arg3[%c1_45, %c0_46, %c0_47] : memref<2x12x32xf32, #tpu.memory_space<vmem>>, vector<1x12x32xf32>
    %86 = vector.shape_cast %85 : vector<1x12x32xf32> to vector<12x32xf32>
    %cst_48 = arith.constant dense<0.000000e+00> : vector<12x32xf32>
    %87 = tpu.matmul %82, %0, %cst_48 {dimension_numbers = #tpu.dot_dimension_numbers<[1], [0], [0], [1], [0, 0, 1, 1], [], []>} : vector<12x32xf32>, vector<32x32xf32>, vector<12x32xf32> -> vector<12x32xf32>
    %cst_49 = arith.constant dense<0.000000e+00> : vector<8x32xf32>
    %88 = tpu.matmul %84, %1, %cst_49 {dimension_numbers = #tpu.dot_dimension_numbers<[1], [0], [0], [1], [0, 0, 1, 1], [], []>} : vector<8x32xf32>, vector<32x32xf32>, vector<8x32xf32> -> vector<8x32xf32>
    %cst_50 = arith.constant dense<0.000000e+00> : vector<12x32xf32>
    %89 = tpu.matmul %86, %2, %cst_50 {dimension_numbers = #tpu.dot_dimension_numbers<[1], [0], [0], [1], [0, 0, 1, 1], [], []>} : vector<12x32xf32>, vector<32x32xf32>, vector<12x32xf32> -> vector<12x32xf32>
    %90 = vector.extract_strided_slice %88 {offsets = [0, 0], sizes = [8, 8], strides = [1, 1]} : vector<8x32xf32> to vector<8x8xf32>
    %91 = vector.extract_strided_slice %87 {offsets = [0, 0], sizes = [12, 8], strides = [1, 1]} : vector<12x32xf32> to vector<12x8xf32>
    %92 = vector.extract_strided_slice %89 {offsets = [0, 0], sizes = [12, 8], strides = [1, 1]} : vector<12x32xf32> to vector<12x8xf32>
    %cst_51 = arith.constant dense<0.000000e+00> : vector<8x12xf32>
    %93 = tpu.matmul %90, %91, %cst_51 {dimension_numbers = #tpu.dot_dimension_numbers<[1], [1], [0], [0], [0, 0, 1, 0], [], []>} : vector<8x8xf32>, vector<12x8xf32>, vector<8x12xf32> -> vector<8x12xf32>
    %cst_52 = arith.constant dense<0xFF800000> : vector<8xf32>
    %94 = vector.multi_reduction <maximumf>, %93, %cst_52 [1] : vector<8x12xf32> to vector<8xf32>
    %95 = vector.shape_cast %94 : vector<8xf32> to vector<8x1xf32>
    %96 = vector.broadcast %95 : vector<8x1xf32> to vector<8x12xf32>
    %97 = arith.subf %93, %96 : vector<8x12xf32>
    %98 = math.exp %97 : vector<8x12xf32>
    %cst_53 = arith.constant dense<0.000000e+00> : vector<8xf32>
    %99 = vector.multi_reduction <add>, %98, %cst_53 [1] : vector<8x12xf32> to vector<8xf32>
    %100 = vector.shape_cast %99 : vector<8xf32> to vector<8x1xf32>
    %cst_54 = arith.constant dense<0.000000e+00> : vector<8x8xf32>
    %101 = tpu.matmul %98, %92, %cst_54 {dimension_numbers = #tpu.dot_dimension_numbers<[1], [0], [0], [1], [0, 0, 1, 1], [], []>} : vector<8x12xf32>, vector<12x8xf32>, vector<8x8xf32> -> vector<8x8xf32>
    %102 = tpu.reciprocal %100 : vector<8x1xf32> -> vector<8x1xf32>
    %103 = vector.broadcast %102 : vector<8x1xf32> to vector<8x8xf32>
    %104 = arith.mulf %101, %103 : vector<8x8xf32>
    %105 = vector.extract_strided_slice %88 {offsets = [0, 8], sizes = [8, 8], strides = [1, 1]} : vector<8x32xf32> to vector<8x8xf32>
    %106 = vector.extract_strided_slice %87 {offsets = [0, 8], sizes = [12, 8], strides = [1, 1]} : vector<12x32xf32> to vector<12x8xf32>
    %107 = vector.extract_strided_slice %89 {offsets = [0, 8], sizes = [12, 8], strides = [1, 1]} : vector<12x32xf32> to vector<12x8xf32>
    %cst_55 = arith.constant dense<0.000000e+00> : vector<8x12xf32>
    %108 = tpu.matmul %105, %106, %cst_55 {dimension_numbers = #tpu.dot_dimension_numbers<[1], [1], [0], [0], [0, 0, 1, 0], [], []>} : vector<8x8xf32>, vector<12x8xf32>, vector<8x12xf32> -> vector<8x12xf32>
    %cst_56 = arith.constant dense<0xFF800000> : vector<8xf32>
    %109 = vector.multi_reduction <maximumf>, %108, %cst_56 [1] : vector<8x12xf32> to vector<8xf32>
    %110 = vector.shape_cast %109 : vector<8xf32> to vector<8x1xf32>
    %111 = vector.broadcast %110 : vector<8x1xf32> to vector<8x12xf32>
    %112 = arith.subf %108, %111 : vector<8x12xf32>
    %113 = math.exp %112 : vector<8x12xf32>
    %cst_57 = arith.constant dense<0.000000e+00> : vector<8xf32>
    %114 = vector.multi_reduction <add>, %113, %cst_57 [1] : vector<8x12xf32> to vector<8xf32>
    %115 = vector.shape_cast %114 : vector<8xf32> to vector<8x1xf32>
    %cst_58 = arith.constant dense<0.000000e+00> : vector<8x8xf32>
    %116 = tpu.matmul %113, %107, %cst_58 {dimension_numbers = #tpu.dot_dimension_numbers<[1], [0], [0], [1], [0, 0, 1, 1], [], []>} : vector<8x12xf32>, vector<12x8xf32>, vector<8x8xf32> -> vector<8x8xf32>
    %117 = tpu.reciprocal %115 : vector<8x1xf32> -> vector<8x1xf32>
    %118 = vector.broadcast %117 : vector<8x1xf32> to vector<8x8xf32>
    %119 = arith.mulf %116, %118 : vector<8x8xf32>
    %120 = vector.extract_strided_slice %88 {offsets = [0, 16], sizes = [8, 8], strides = [1, 1]} : vector<8x32xf32> to vector<8x8xf32>
    %121 = vector.extract_strided_slice %87 {offsets = [0, 16], sizes = [12, 8], strides = [1, 1]} : vector<12x32xf32> to vector<12x8xf32>
    %122 = vector.extract_strided_slice %89 {offsets = [0, 16], sizes = [12, 8], strides = [1, 1]} : vector<12x32xf32> to vector<12x8xf32>
    %cst_59 = arith.constant dense<0.000000e+00> : vector<8x12xf32>
    %123 = tpu.matmul %120, %121, %cst_59 {dimension_numbers = #tpu.dot_dimension_numbers<[1], [1], [0], [0], [0, 0, 1, 0], [], []>} : vector<8x8xf32>, vector<12x8xf32>, vector<8x12xf32> -> vector<8x12xf32>
    %cst_60 = arith.constant dense<0xFF800000> : vector<8xf32>
    %124 = vector.multi_reduction <maximumf>, %123, %cst_60 [1] : vector<8x12xf32> to vector<8xf32>
    %125 = vector.shape_cast %124 : vector<8xf32> to vector<8x1xf32>
    %126 = vector.broadcast %125 : vector<8x1xf32> to vector<8x12xf32>
    %127 = arith.subf %123, %126 : vector<8x12xf32>
    %128 = math.exp %127 : vector<8x12xf32>
    %cst_61 = arith.constant dense<0.000000e+00> : vector<8xf32>
    %129 = vector.multi_reduction <add>, %128, %cst_61 [1] : vector<8x12xf32> to vector<8xf32>
    %130 = vector.shape_cast %129 : vector<8xf32> to vector<8x1xf32>
    %cst_62 = arith.constant dense<0.000000e+00> : vector<8x8xf32>
    %131 = tpu.matmul %128, %122, %cst_62 {dimension_numbers = #tpu.dot_dimension_numbers<[1], [0], [0], [1], [0, 0, 1, 1], [], []>} : vector<8x12xf32>, vector<12x8xf32>, vector<8x8xf32> -> vector<8x8xf32>
    %132 = tpu.reciprocal %130 : vector<8x1xf32> -> vector<8x1xf32>
    %133 = vector.broadcast %132 : vector<8x1xf32> to vector<8x8xf32>
    %134 = arith.mulf %131, %133 : vector<8x8xf32>
    %135 = vector.extract_strided_slice %88 {offsets = [0, 24], sizes = [8, 8], strides = [1, 1]} : vector<8x32xf32> to vector<8x8xf32>
    %136 = vector.extract_strided_slice %87 {offsets = [0, 24], sizes = [12, 8], strides = [1, 1]} : vector<12x32xf32> to vector<12x8xf32>
    %137 = vector.extract_strided_slice %89 {offsets = [0, 24], sizes = [12, 8], strides = [1, 1]} : vector<12x32xf32> to vector<12x8xf32>
    %cst_63 = arith.constant dense<0.000000e+00> : vector<8x12xf32>
    %138 = tpu.matmul %135, %136, %cst_63 {dimension_numbers = #tpu.dot_dimension_numbers<[1], [1], [0], [0], [0, 0, 1, 0], [], []>} : vector<8x8xf32>, vector<12x8xf32>, vector<8x12xf32> -> vector<8x12xf32>
    %cst_64 = arith.constant dense<0xFF800000> : vector<8xf32>
    %139 = vector.multi_reduction <maximumf>, %138, %cst_64 [1] : vector<8x12xf32> to vector<8xf32>
    %140 = vector.shape_cast %139 : vector<8xf32> to vector<8x1xf32>
    %141 = vector.broadcast %140 : vector<8x1xf32> to vector<8x12xf32>
    %142 = arith.subf %138, %141 : vector<8x12xf32>
    %143 = math.exp %142 : vector<8x12xf32>
    %cst_65 = arith.constant dense<0.000000e+00> : vector<8xf32>
    %144 = vector.multi_reduction <add>, %143, %cst_65 [1] : vector<8x12xf32> to vector<8xf32>
    %145 = vector.shape_cast %144 : vector<8xf32> to vector<8x1xf32>
    %cst_66 = arith.constant dense<0.000000e+00> : vector<8x8xf32>
    %146 = tpu.matmul %143, %137, %cst_66 {dimension_numbers = #tpu.dot_dimension_numbers<[1], [0], [0], [1], [0, 0, 1, 1], [], []>} : vector<8x12xf32>, vector<12x8xf32>, vector<8x8xf32> -> vector<8x8xf32>
    %147 = tpu.reciprocal %145 : vector<8x1xf32> -> vector<8x1xf32>
    %148 = vector.broadcast %147 : vector<8x1xf32> to vector<8x8xf32>
    %149 = arith.mulf %146, %148 : vector<8x8xf32>
    %150 = tpu.concatenate %104, %119, %134, %149 in 1 : vector<8x8xf32>, vector<8x8xf32>, vector<8x8xf32>, vector<8x8xf32> -> vector<8x32xf32>
    %cst_67 = arith.constant dense<0.000000e+00> : vector<8x16xf32>
    %151 = tpu.matmul %150, %3, %cst_67 {dimension_numbers = #tpu.dot_dimension_numbers<[1], [0], [0], [1], [0, 0, 1, 1], [], []>} : vector<8x32xf32>, vector<32x16xf32>, vector<8x16xf32> -> vector<8x16xf32>
    %152 = vector.broadcast %4 : vector<1x16xf32> to vector<8x16xf32>
    %153 = arith.addf %151, %152 : vector<8x16xf32>
    %c1_68 = arith.constant 1 : index
    %c0_69 = arith.constant 0 : index
    %c0_70 = arith.constant 0 : index
    %154 = vector.load %arg9[%c1_68, %c0_69, %c0_70] : memref<2x8x16xf32, #tpu.memory_space<vmem>>, vector<1x8x16xf32>
    %155 = vector.shape_cast %154 : vector<1x8x16xf32> to vector<8x16xf32>
    %156 = vector.shape_cast %153 : vector<8x16xf32> to vector<1x8x16xf32>
    tpu.vector_store %arg9[%c1_68, %c0_69, %c0_70], %156 {strides = array<i32>} : memref<2x8x16xf32, #tpu.memory_space<vmem>>, vector<1x8x16xf32>,
    return
  }
  func.func @transform_0(%arg0: i32) -> (i32, i32, i32) {
    %c0_i32 = arith.constant 0 : i32
    %c0_i32_0 = arith.constant 0 : i32
    %c0_i32_1 = arith.constant 0 : i32
    return %arg0, %c0_i32, %c0_i32_0 : i32, i32, i32
  }
  func.func @transform_1(%arg0: i32) -> (i32, i32, i32) {
    %c0_i32 = arith.constant 0 : i32
    %c0_i32_0 = arith.constant 0 : i32
    %c0_i32_1 = arith.constant 0 : i32
    return %arg0, %c0_i32, %c0_i32_0 : i32, i32, i32
  }
  func.func @transform_2(%arg0: i32) -> (i32, i32, i32) {
    %c0_i32 = arith.constant 0 : i32
    %c0_i32_0 = arith.constant 0 : i32
    %c0_i32_1 = arith.constant 0 : i32
    return %arg0, %c0_i32, %c0_i32_0 : i32, i32, i32
  }
  func.func @transform_3(%arg0: i32) -> (i32, i32) {
    %c0_i32 = arith.constant 0 : i32
    %c0_i32_0 = arith.constant 0 : i32
    %c0_i32_1 = arith.constant 0 : i32
    return %c0_i32, %c0_i32_0 : i32, i32
  }
  func.func @transform_4(%arg0: i32) -> (i32, i32) {
    %c0_i32 = arith.constant 0 : i32
    %c0_i32_0 = arith.constant 0 : i32
    %c0_i32_1 = arith.constant 0 : i32
    return %c0_i32, %c0_i32_0 : i32, i32
  }
  func.func @transform_5(%arg0: i32) -> (i32, i32) {
    %c0_i32 = arith.constant 0 : i32
    %c0_i32_0 = arith.constant 0 : i32
    %c0_i32_1 = arith.constant 0 : i32
    return %c0_i32, %c0_i32_0 : i32, i32
  }
  func.func @transform_6(%arg0: i32) -> (i32, i32) {
    %c0_i32 = arith.constant 0 : i32
    %c0_i32_0 = arith.constant 0 : i32
    %c0_i32_1 = arith.constant 0 : i32
    return %c0_i32, %c0_i32_0 : i32, i32
  }
  func.func @transform_7(%arg0: i32) -> (i32, i32) {
    %c0_i32 = arith.constant 0 : i32
    %c0_i32_0 = arith.constant 0 : i32
    %c0_i32_1 = arith.constant 0 : i32
    return %c0_i32, %c0_i32_0 : i32, i32
  }
  func.func @transform_8(%arg0: i32) -> (i32, i32, i32) {
    %c0_i32 = arith.constant 0 : i32
    %c0_i32_0 = arith.constant 0 : i32
    %c0_i32_1 = arith.constant 0 : i32
    return %arg0, %c0_i32, %c0_i32_0 : i32, i32, i32
  }
}

</mosaic_0001>

<llo_original>
// kernel: tpu_custom_call.1
$region0: #{tpu_custom_call.1}
  #allocation0 [shape = 'u32[]', space=smem, size = 0x4, offset = 0x4, fixed_abs, tag = 'smem constant byte address 0x4 - core index']
  #allocation1 [shape = 'u32[144,128]{1,0:T(1,128)}', space=vmem, size = 0x12000, scoped, tag = 'internal scratch']
  %s0 = inlined_call_operand.vmem [shape: f32[2,12,32], index: 0, kind: input, shape index: {}]
  %s1 = inlined_call_operand.vmem [shape: f32[2,8,32], index: 1, kind: input, shape index: {}]
  %s2 = inlined_call_operand.vmem [shape: f32[2,12,32], index: 2, kind: input, shape index: {}]
  %s3 = inlined_call_operand.vmem [shape: f32[32,32], index: 3, kind: input, shape index: {}]
  %s4 = inlined_call_operand.vmem [shape: f32[32,32], index: 4, kind: input, shape index: {}]
  %s5 = inlined_call_operand.vmem [shape: f32[32,32], index: 5, kind: input, shape index: {}]
  %s6 = inlined_call_operand.vmem [shape: f32[32,16], index: 6, kind: input, shape index: {}]
  %s7 = inlined_call_operand.vmem [shape: f32[1,16], index: 7, kind: input, shape index: {}]
  %s8 = inlined_call_operand.hbm [shape: f32[2,8,16], index: 8, kind: output, shape index: {}]
  %s9 = sld [smem:[#allocation0]]
  $region42: #{tpu_custom_call.1} parent=0
    _
  %s11 = ssub.s32 1, %s9
  %s12 = scalar_select 0, %s11, %s9
  $region1: #{tpu_custom_call.1} parent=0
    #allocation2 [shape = 'u8[8192]{0}', space=vmem, size = 0x2000, scoped, tag = 'output window, operand 0, single buffered']
    #allocation3 [shape = 's32[1]{0}', space=sflag, size = 0x4, scoped, tag = 'scoped memory for tpu_custom_call.1']
    %13 = vsyncpa [#allocation3], 0
    // Predicated region
    $region2: #{tpu_custom_call.1} parent=1 // pred_check
      _
    $region3: #{tpu_custom_call.1} parent=1 // pred_check_branch
      %15 = sbr.rel (0) target = $region5
    $region4: #{tpu_custom_call.1} parent=1 // pred_region
      _
    $region5: #{tpu_custom_call.1} parent=1 // pred_fallthru
      _
    // Predicated region
    $region6: #{tpu_custom_call.1} parent=1 // pred_check
      _
    $region7: #{tpu_custom_call.1} parent=1 // pred_check_branch
      %17 = sbr.rel (0) target = $region9
    $region8: #{tpu_custom_call.1} parent=1 // pred_region
      _
    $region9: #{tpu_custom_call.1} parent=1 // pred_fallthru
      _
    // Predicated region
    $region10: #{tpu_custom_call.1} parent=1 // pred_check
      _
    $region11: #{tpu_custom_call.1} parent=1 // pred_check_branch
      %19 = sbr.rel (0) target = $region13
    $region12: #{tpu_custom_call.1} parent=1 // pred_region
      _
    $region13: #{tpu_custom_call.1} parent=1 // pred_fallthru
      _
    // Predicated region
    $region14: #{tpu_custom_call.1} parent=1 // pred_check
      _
    $region15: #{tpu_custom_call.1} parent=1 // pred_check_branch
      %21 = sbr.rel (0) target = $region17
    $region16: #{tpu_custom_call.1} parent=1 // pred_region
      _
    $region17: #{tpu_custom_call.1} parent=1 // pred_fallthru
      _
    // Predicated region
    $region18: #{tpu_custom_call.1} parent=1 // pred_check
      _
    $region19: #{tpu_custom_call.1} parent=1 // pred_check_branch
      %23 = sbr.rel (0) target = $region21
    $region20: #{tpu_custom_call.1} parent=1 // pred_region
      _
    $region21: #{tpu_custom_call.1} parent=1 // pred_fallthru
      _
    // Predicated region
    $region22: #{tpu_custom_call.1} parent=1 // pred_check
      _
    $region23: #{tpu_custom_call.1} parent=1 // pred_check_branch
      %25 = sbr.rel (0) target = $region25
    $region24: #{tpu_custom_call.1} parent=1 // pred_region
      _
    $region25: #{tpu_custom_call.1} parent=1 // pred_fallthru
      _
    // Predicated region
    $region26: #{tpu_custom_call.1} parent=1 // pred_check
      _
    $region27: #{tpu_custom_call.1} parent=1 // pred_check_branch
      %27 = sbr.rel (0) target = $region29
    $region28: #{tpu_custom_call.1} parent=1 // pred_region
      _
    $region29: #{tpu_custom_call.1} parent=1 // pred_fallthru
      _
    // Predicated region
    $region30: #{tpu_custom_call.1} parent=1 // pred_check
      _
    $region31: #{tpu_custom_call.1} parent=1 // pred_check_branch
      %29 = sbr.rel (0) target = $region33
    $region32: #{tpu_custom_call.1} parent=1 // pred_region
      _
    $region33: #{tpu_custom_call.1} parent=1 // pred_fallthru
      _
    %v30 = vld [vmem:[%s3] sm:$0xff]
    %v31 = vld [vmem:[%s3 + $0x8] sm:$0xff]
    %v32 = vld [vmem:[%s3 + $0x10] sm:$0xff]
    %v33 = vld [vmem:[%s3 + $0x18] sm:$0xff]
    %v34 = vld [vmem:[%s4] sm:$0xff]
    %v35 = vld [vmem:[%s4 + $0x8] sm:$0xff]
    %v36 = vld [vmem:[%s4 + $0x10] sm:$0xff]
    %v37 = vld [vmem:[%s4 + $0x18] sm:$0xff]
    %v38 = vld [vmem:[%s5] sm:$0xff]
    %v39 = vld [vmem:[%s5 + $0x8] sm:$0xff]
    %v40 = vld [vmem:[%s5 + $0x10] sm:$0xff]
    %v41 = vld [vmem:[%s5 + $0x18] sm:$0xff]
    %v42 = vld [vmem:[%s6] sm:$0xff]
    %v43 = vld [vmem:[%s6 + $0x8] sm:$0xff]
    %v44 = vld [vmem:[%s6 + $0x10] sm:$0xff]
    %v45 = vld [vmem:[%s6 + $0x18] sm:$0xff]
    %v46 = vld [vmem:[%s7] sm:$0x1]
    %v47 = vld [vmem:[%s0] sm:$0xff]
    %v48 = vld [vmem:[%s0 + $0x8] sm:$0xf]
    %v49 = vld [vmem:[%s1] sm:$0xff]
    %v50 = vld [vmem:[%s2] sm:$0xff]
    %v51 = vld [vmem:[%s2 + $0x8] sm:$0xf]
    %vm52 = vcmask 261120
    %v54 = vsel %vm52, %v47, 0
    %v57 = vsel %vm52, %v48, 0
    %59 = vmatprep.subr.mxu0 0.0
    %60 = vmatpush1.msra.mxu0 %v30
    %61 = vmatprep.subr.mxu0 0.0
    %62 = vmatpush1.msra.mxu0 %v31
    %63 = vmatprep.subr.mxu0 0.0
    %64 = vmatpush1.msra.mxu0 %v32
    %65 = vmatprep.subr.mxu0 0.0
    %66 = vmatpush1.msra.mxu0 %v33
    %67 = vmatprep.subr.mxu0 0.0
    %68 = vmatpush1.msra.mxu0 0.0
    %69 = vmatprep.subr.mxu0 0.0
    %70 = vmatpush1.msra.mxu0 0.0
    %71 = vmatprep.subr.mxu0 0.0
    %72 = vmatpush1.msra.mxu0 0.0
    %73 = vmatprep.subr.mxu0 0.0
    %74 = vmatpush1.msra.mxu0 0.0
    %75 = vmatprep.subr.mxu0 0.0
    %76 = vmatpush1.msra.mxu0 0.0
    %77 = vmatprep.subr.mxu0 0.0
    %78 = vmatpush1.msra.mxu0 0.0
    %79 = vmatprep.subr.mxu0 0.0
    %80 = vmatpush1.msra.mxu0 0.0
    %81 = vmatprep.subr.mxu0 0.0
    %82 = vmatpush1.msra.mxu0 0.0
    %83 = vmatprep.subr.mxu0 0.0
    %84 = vmatpush1.msra.mxu0 0.0
    %85 = vmatprep.subr.mxu0 0.0
    %86 = vmatpush1.msra.mxu0 0.0
    %87 = vmatprep.subr.mxu0 0.0
    %88 = vmatpush1.msra.mxu0 0.0
    %89 = vmatprep.subr.mxu0 0.0
    %90 = vmatpush1.msra.mxu0 0.0
    %91 = vmatprep.subr.mxu0 0.0
    %92 = vmatpush1.msra.mxu0 0.0
    %93 = vmatprep.subr.mxu0 0.0
    %94 = vmatpush1.msra.mxu0 0.0
    %95 = vmatprep.subr.mxu0 0.0
    %96 = vmatpush1.msra.mxu0 0.0
    %97 = vmatprep.subr.mxu0 0.0
    %98 = vmatpush1.msra.mxu0 0.0
    %99 = vmatprep.subr.mxu0 0.0
    %100 = vmatpush1.msra.mxu0 0.0
    %101 = vmatprep.subr.mxu0 0.0
    %102 = vmatpush1.msra.mxu0 0.0
    %103 = vmatprep.subr.mxu0 0.0
    %104 = vmatpush1.msra.mxu0 0.0
    %105 = vmatprep.subr.mxu0 0.0
    %106 = vmatpush1.msra.mxu0 0.0
    %107 = vmatprep.subr.mxu0 0.0
    %108 = vmatpush1.msra.mxu0 0.0
    %109 = vmatprep.subr.mxu0 0.0
    %110 = vmatpush1.msra.mxu0 0.0
    %111 = vmatprep.subr.mxu0 0.0
    %112 = vmatpush1.msra.mxu0 0.0
    %113 = vmatprep.subr.mxu0 0.0
    %114 = vmatpush1.msra.mxu0 0.0
    %115 = vmatprep.subr.mxu0 0.0
    %116 = vmatpush1.msra.mxu0 0.0
    %117 = vmatprep.subr.mxu0 0.0
    %118 = vmatpush1.msra.mxu0 0.0
    %119 = vmatprep.subr.mxu0 0.0
    %120 = vmatpush1.msra.mxu0 0.0
    %121 = vmatprep.subr.mxu0 0.0
    %122 = vmatpush1.msra.mxu0 0.0
    %123 = vmatprep.mubr.f32.mxu0 0.0
    %124 = vmatmul.mubr.f32.gmra.mrb[0].mxu0 %v54
    %v125 = vpop.f32.mrb[0].mxu0
    %v126 = vadd.f32 0.0, %v125
    %v127 = vpop.f32.mrb[0].mxu0
    %128 = vmatprep.mubr.f32.mxu0 0.0
    %129 = vmatmul.mubr.f32.gmra.mrb[0].mxu0 %v57
    %v130 = vpop.f32.mrb[0].mxu0
    %v131 = vadd.f32 0.0, %v130
    %v132 = vpop.f32.mrb[0].mxu0
    %133 = vdwg.mxu0
    %v135 = vsel %vm52, %v49, 0
    %137 = vmatprep.subr.mxu0 0.0
    %138 = vmatpush1.msra.mxu0 %v34
    %139 = vmatprep.subr.mxu0 0.0
    %140 = vmatpush1.msra.mxu0 %v35
    %141 = vmatprep.subr.mxu0 0.0
    %142 = vmatpush1.msra.mxu0 %v36
    %143 = vmatprep.subr.mxu0 0.0
    %144 = vmatpush1.msra.mxu0 %v37
    %145 = vmatprep.subr.mxu0 0.0
    %146 = vmatpush1.msra.mxu0 0.0
    %147 = vmatprep.subr.mxu0 0.0
    %148 = vmatpush1.msra.mxu0 0.0
    %149 = vmatprep.subr.mxu0 0.0
    %150 = vmatpush1.msra.mxu0 0.0
    %151 = vmatprep.subr.mxu0 0.0
    %152 = vmatpush1.msra.mxu0 0.0
    %153 = vmatprep.subr.mxu0 0.0
    %154 = vmatpush1.msra.mxu0 0.0
    %155 = vmatprep.subr.mxu0 0.0
    %156 = vmatpush1.msra.mxu0 0.0
    %157 = vmatprep.subr.mxu0 0.0
    %158 = vmatpush1.msra.mxu0 0.0
    %159 = vmatprep.subr.mxu0 0.0
    %160 = vmatpush1.msra.mxu0 0.0
    %161 = vmatprep.subr.mxu0 0.0
    %162 = vmatpush1.msra.mxu0 0.0
    %163 = vmatprep.subr.mxu0 0.0
    %164 = vmatpush1.msra.mxu0 0.0
    %165 = vmatprep.subr.mxu0 0.0
    %166 = vmatpush1.msra.mxu0 0.0
    %167 = vmatprep.subr.mxu0 0.0
    %168 = vmatpush1.msra.mxu0 0.0
    %169 = vmatprep.subr.mxu0 0.0
    %170 = vmatpush1.msra.mxu0 0.0
    %171 = vmatprep.subr.mxu0 0.0
    %172 = vmatpush1.msra.mxu0 0.0
    %173 = vmatprep.subr.mxu0 0.0
    %174 = vmatpush1.msra.mxu0 0.0
    %175 = vmatprep.subr.mxu0 0.0
    %176 = vmatpush1.msra.mxu0 0.0
    %177 = vmatprep.subr.mxu0 0.0
    %178 = vmatpush1.msra.mxu0 0.0
    %179 = vmatprep.subr.mxu0 0.0
    %180 = vmatpush1.msra.mxu0 0.0
    %181 = vmatprep.subr.mxu0 0.0
    %182 = vmatpush1.msra.mxu0 0.0
    %183 = vmatprep.subr.mxu0 0.0
    %184 = vmatpush1.msra.mxu0 0.0
    %185 = vmatprep.subr.mxu0 0.0
    %186 = vmatpush1.msra.mxu0 0.0
    %187 = vmatprep.subr.mxu0 0.0
    %188 = vmatpush1.msra.mxu0 0.0
    %189 = vmatprep.subr.mxu0 0.0
    %190 = vmatpush1.msra.mxu0 0.0
    %191 = vmatprep.subr.mxu0 0.0
    %192 = vmatpush1.msra.mxu0 0.0
    %193 = vmatprep.subr.mxu0 0.0
    %194 = vmatpush1.msra.mxu0 0.0
    %195 = vmatprep.subr.mxu0 0.0
    %196 = vmatpush1.msra.mxu0 0.0
    %197 = vmatprep.subr.mxu0 0.0
    %198 = vmatpush1.msra.mxu0 0.0
    %199 = vmatprep.subr.mxu0 0.0
    %200 = vmatpush1.msra.mxu0 0.0
    %201 = vmatprep.mubr.f32.mxu0 0.0
    %202 = vmatmul.mubr.f32.gmra.mrb[0].mxu0 %v135
    %v203 = vpop.f32.mrb[0].mxu0
    %v204 = vadd.f32 0.0, %v203
    %v205 = vpop.f32.mrb[0].mxu0
    %206 = vdwg.mxu0
    %v208 = vsel %vm52, %v50, 0
    %v211 = vsel %vm52, %v51, 0
    %213 = vmatprep.subr.mxu0 0.0
    %214 = vmatpush1.msra.mxu0 %v38
    %215 = vmatprep.subr.mxu0 0.0
    %216 = vmatpush1.msra.mxu0 %v39
    %217 = vmatprep.subr.mxu0 0.0
    %218 = vmatpush1.msra.mxu0 %v40
    %219 = vmatprep.subr.mxu0 0.0
    %220 = vmatpush1.msra.mxu0 %v41
    %221 = vmatprep.subr.mxu0 0.0
    %222 = vmatpush1.msra.mxu0 0.0
    %223 = vmatprep.subr.mxu0 0.0
    %224 = vmatpush1.msra.mxu0 0.0
    %225 = vmatprep.subr.mxu0 0.0
    %226 = vmatpush1.msra.mxu0 0.0
    %227 = vmatprep.subr.mxu0 0.0
    %228 = vmatpush1.msra.mxu0 0.0
    %229 = vmatprep.subr.mxu0 0.0
    %230 = vmatpush1.msra.mxu0 0.0
    %231 = vmatprep.subr.mxu0 0.0
    %232 = vmatpush1.msra.mxu0 0.0
    %233 = vmatprep.subr.mxu0 0.0
    %234 = vmatpush1.msra.mxu0 0.0
    %235 = vmatprep.subr.mxu0 0.0
    %236 = vmatpush1.msra.mxu0 0.0
    %237 = vmatprep.subr.mxu0 0.0
    %238 = vmatpush1.msra.mxu0 0.0
    %239 = vmatprep.subr.mxu0 0.0
    %240 = vmatpush1.msra.mxu0 0.0
    %241 = vmatprep.subr.mxu0 0.0
    %242 = vmatpush1.msra.mxu0 0.0
    %243 = vmatprep.subr.mxu0 0.0
    %244 = vmatpush1.msra.mxu0 0.0
    %245 = vmatprep.subr.mxu0 0.0
    %246 = vmatpush1.msra.mxu0 0.0
    %247 = vmatprep.subr.mxu0 0.0
    %248 = vmatpush1.msra.mxu0 0.0
    %249 = vmatprep.subr.mxu0 0.0
    %250 = vmatpush1.msra.mxu0 0.0
    %251 = vmatprep.subr.mxu0 0.0
    %252 = vmatpush1.msra.mxu0 0.0
    %253 = vmatprep.subr.mxu0 0.0
    %254 = vmatpush1.msra.mxu0 0.0
    %255 = vmatprep.subr.mxu0 0.0
    %256 = vmatpush1.msra.mxu0 0.0
    %257 = vmatprep.subr.mxu0 0.0
    %258 = vmatpush1.msra.mxu0 0.0
    %259 = vmatprep.subr.mxu0 0.0
    %260 = vmatpush1.msra.mxu0 0.0
    %261 = vmatprep.subr.mxu0 0.0
    %262 = vmatpush1.msra.mxu0 0.0
    %263 = vmatprep.subr.mxu0 0.0
    %264 = vmatpush1.msra.mxu0 0.0
    %265 = vmatprep.subr.mxu0 0.0
    %266 = vmatpush1.msra.mxu0 0.0
    %267 = vmatprep.subr.mxu0 0.0
    %268 = vmatpush1.msra.mxu0 0.0
    %269 = vmatprep.subr.mxu0 0.0
    %270 = vmatpush1.msra.mxu0 0.0
    %271 = vmatprep.subr.mxu0 0.0
    %272 = vmatpush1.msra.mxu0 0.0
    %273 = vmatprep.subr.mxu0 0.0
    %274 = vmatpush1.msra.mxu0 0.0
    %275 = vmatprep.subr.mxu0 0.0
    %276 = vmatpush1.msra.mxu0 0.0
    %277 = vmatprep.mubr.f32.mxu0 0.0
    %278 = vmatmul.mubr.f32.gmra.mrb[0].mxu0 %v208
    %v279 = vpop.f32.mrb[0].mxu0
    %v280 = vadd.f32 0.0, %v279
    %v281 = vpop.f32.mrb[0].mxu0
    %282 = vmatprep.mubr.f32.mxu0 0.0
    %283 = vmatmul.mubr.f32.gmra.mrb[0].mxu0 %v211
    %v284 = vpop.f32.mrb[0].mxu0
    %v285 = vadd.f32 0.0, %v284
    %v286 = vpop.f32.mrb[0].mxu0
    %287 = vdwg.mxu0
    %vm288 = vcmask 64512
    %v290 = vsel %vm288, %v204, 0
    %v293 = vsel %vm288, %v126, 0
    %v296 = vsel %vm288, %v131, 0
    %298 = vmatprep.subr.mxu0 0.0
    %299 = vmatpush1.xpose.msra.mxu0 %v293
    %300 = vmatprep.subr.mxu0 0.0
    %301 = vmatpush1.xpose.msra.mxu0 %v296
    %302 = vmatprep.subr.mxu0 0.0
    %303 = vmatpush1.xpose.msra.mxu0 0.0
    %304 = vmatprep.subr.mxu0 0.0
    %305 = vmatpush1.xpose.msra.mxu0 0.0
    %306 = vmatprep.subr.mxu0 0.0
    %307 = vmatpush1.xpose.msra.mxu0 0.0
    %308 = vmatprep.subr.mxu0 0.0
    %309 = vmatpush1.xpose.msra.mxu0 0.0
    %310 = vmatprep.subr.mxu0 0.0
    %311 = vmatpush1.xpose.msra.mxu0 0.0
    %312 = vmatprep.subr.mxu0 0.0
    %313 = vmatpush1.xpose.msra.mxu0 0.0
    %314 = vmatprep.subr.mxu0 0.0
    %315 = vmatpush1.xpose.msra.mxu0 0.0
    %316 = vmatprep.subr.mxu0 0.0
    %317 = vmatpush1.xpose.msra.mxu0 0.0
    %318 = vmatprep.subr.mxu0 0.0
    %319 = vmatpush1.xpose.msra.mxu0 0.0
    %320 = vmatprep.subr.mxu0 0.0
    %321 = vmatpush1.xpose.msra.mxu0 0.0
    %322 = vmatprep.subr.mxu0 0.0
    %323 = vmatpush1.xpose.msra.mxu0 0.0
    %324 = vmatprep.subr.mxu0 0.0
    %325 = vmatpush1.xpose.msra.mxu0 0.0
    %326 = vmatprep.subr.mxu0 0.0
    %327 = vmatpush1.xpose.msra.mxu0 0.0
    %328 = vmatprep.subr.mxu0 0.0
    %329 = vmatpush1.xpose.msra.mxu0 0.0
    %330 = vmatprep.subr.mxu0 0.0
    %331 = vmatpush1.xpose.msra.mxu0 0.0
    %332 = vmatprep.subr.mxu0 0.0
    %333 = vmatpush1.xpose.msra.mxu0 0.0
    %334 = vmatprep.subr.mxu0 0.0
    %335 = vmatpush1.xpose.msra.mxu0 0.0
    %336 = vmatprep.subr.mxu0 0.0
    %337 = vmatpush1.xpose.msra.mxu0 0.0
    %338 = vmatprep.subr.mxu0 0.0
    %339 = vmatpush1.xpose.msra.mxu0 0.0
    %340 = vmatprep.subr.mxu0 0.0
    %341 = vmatpush1.xpose.msra.mxu0 0.0
    %342 = vmatprep.subr.mxu0 0.0
    %343 = vmatpush1.xpose.msra.mxu0 0.0
    %344 = vmatprep.subr.mxu0 0.0
    %345 = vmatpush1.xpose.msra.mxu0 0.0
    %346 = vmatprep.subr.mxu0 0.0
    %347 = vmatpush1.xpose.msra.mxu0 0.0
    %348 = vmatprep.subr.mxu0 0.0
    %349 = vmatpush1.xpose.msra.mxu0 0.0
    %350 = vmatprep.subr.mxu0 0.0
    %351 = vmatpush1.xpose.msra.mxu0 0.0
    %352 = vmatprep.subr.mxu0 0.0
    %353 = vmatpush1.xpose.msra.mxu0 0.0
    %354 = vmatprep.subr.mxu0 0.0
    %355 = vmatpush1.xpose.msra.mxu0 0.0
    %356 = vmatprep.subr.mxu0 0.0
    %357 = vmatpush1.xpose.msra.mxu0 0.0
    %358 = vmatprep.subr.mxu0 0.0
    %359 = vmatpush1.xpose.msra.mxu0 0.0
    %360 = vmatprep.subr.mxu0 0.0
    %361 = vmatpush1.xpose.msra.mxu0 0.0
    %362 = vmatprep.mubr.f32.mxu0 0.0
    %363 = vmatmul.mubr.f32.gmra.mrb[0].mxu0 %v290
    %v364 = vpop.f32.mrb[0].mxu0
    %v365 = vadd.f32 0.0, %v364
    %v366 = vpop.f32.mrb[0].mxu0
    %367 = vdwg.mxu0
    %vm368 = vcmask 97280
    %v369 = vsel %vm368, %v365, -inf
    %370 = vmax.xlane.f32.xlu0 %v369
    %v371 = vpop.xlane.xlu0 %370
    %v372 = vsub.f32 %v365, %v371
    %v373 = vmul.f32 %v372, 1.442695
    %v374 = vpow.pop %v373
    %v375 = vsel %vm368, %v374, 0.0
    %376 = vadd.xlane.f32.xlu0 %v375
    %v377 = vpop.xlane.xlu0 %376
    %v379 = vsel %vm368, %v374, 0
    %vm381 = vcmask 1043456
    %v383 = vsel %vm381, %v285, 0
    %385 = vmatprep.subr.mxu0 0.0
    %386 = vmatpush1.msra.mxu0 %v280
    %387 = vmatprep.subr.mxu0 0.0
    %388 = vmatpush1.msra.mxu0 %v383
    %389 = vmatprep.subr.mxu0 0.0
    %390 = vmatpush1.msra.mxu0 0.0
    %391 = vmatprep.subr.mxu0 0.0
    %392 = vmatpush1.msra.mxu0 0.0
    %393 = vmatprep.subr.mxu0 0.0
    %394 = vmatpush1.msra.mxu0 0.0
    %395 = vmatprep.subr.mxu0 0.0
    %396 = vmatpush1.msra.mxu0 0.0
    %397 = vmatprep.subr.mxu0 0.0
    %398 = vmatpush1.msra.mxu0 0.0
    %399 = vmatprep.subr.mxu0 0.0
    %400 = vmatpush1.msra.mxu0 0.0
    %401 = vmatprep.subr.mxu0 0.0
    %402 = vmatpush1.msra.mxu0 0.0
    %403 = vmatprep.subr.mxu0 0.0
    %404 = vmatpush1.msra.mxu0 0.0
    %405 = vmatprep.subr.mxu0 0.0
    %406 = vmatpush1.msra.mxu0 0.0
    %407 = vmatprep.subr.mxu0 0.0
    %408 = vmatpush1.msra.mxu0 0.0
    %409 = vmatprep.subr.mxu0 0.0
    %410 = vmatpush1.msra.mxu0 0.0
    %411 = vmatprep.subr.mxu0 0.0
    %412 = vmatpush1.msra.mxu0 0.0
    %413 = vmatprep.subr.mxu0 0.0
    %414 = vmatpush1.msra.mxu0 0.0
    %415 = vmatprep.subr.mxu0 0.0
    %416 = vmatpush1.msra.mxu0 0.0
    %417 = vmatprep.subr.mxu0 0.0
    %418 = vmatpush1.msra.mxu0 0.0
    %419 = vmatprep.subr.mxu0 0.0
    %420 = vmatpush1.msra.mxu0 0.0
    %421 = vmatprep.subr.mxu0 0.0
    %422 = vmatpush1.msra.mxu0 0.0
    %423 = vmatprep.subr.mxu0 0.0
    %424 = vmatpush1.msra.mxu0 0.0
    %425 = vmatprep.subr.mxu0 0.0
    %426 = vmatpush1.msra.mxu0 0.0
    %427 = vmatprep.subr.mxu0 0.0
    %428 = vmatpush1.msra.mxu0 0.0
    %429 = vmatprep.subr.mxu0 0.0
    %430 = vmatpush1.msra.mxu0 0.0
    %431 = vmatprep.subr.mxu0 0.0
    %432 = vmatpush1.msra.mxu0 0.0
    %433 = vmatprep.subr.mxu0 0.0
    %434 = vmatpush1.msra.mxu0 0.0
    %435 = vmatprep.subr.mxu0 0.0
    %436 = vmatpush1.msra.mxu0 0.0
    %437 = vmatprep.subr.mxu0 0.0
    %438 = vmatpush1.msra.mxu0 0.0
    %439 = vmatprep.subr.mxu0 0.0
    %440 = vmatpush1.msra.mxu0 0.0
    %441 = vmatprep.subr.mxu0 0.0
    %442 = vmatpush1.msra.mxu0 0.0
    %443 = vmatprep.subr.mxu0 0.0
    %444 = vmatpush1.msra.mxu0 0.0
    %445 = vmatprep.subr.mxu0 0.0
    %446 = vmatpush1.msra.mxu0 0.0
    %447 = vmatprep.subr.mxu0 0.0
    %448 = vmatpush1.msra.mxu0 0.0
    %449 = vmatprep.mubr.f32.mxu0 0.0
    %450 = vmatmul.mubr.f32.gmra.mrb[0].mxu0 %v379
    %v451 = vpop.f32.mrb[0].mxu0
    %v452 = vadd.f32 0.0, %v451
    %v453 = vpop.f32.mrb[0].mxu0
    %454 = vdwg.mxu0
    %v455 = vrcp.pop %v377
    %v456 = vmul.f32 %v452, %v455
    %457 = vrot.lane.b32.xlu0 %v204, 120
    %v458 = vpop.permute.xlu0 %457
    %459 = vrot.lane.b32.xlu0 %v126, 120
    %v460 = vpop.permute.xlu0 %459
    %461 = vrot.lane.b32.xlu0 %v131, 120
    %v462 = vpop.permute.xlu0 %461
    %v463 = vsel %vm288, %v458, 0
    %v465 = vsel %vm288, %v460, 0
    %v467 = vsel %vm288, %v462, 0
    %469 = vmatprep.subr.mxu0 0.0
    %470 = vmatpush1.xpose.msra.mxu0 %v465
    %471 = vmatprep.subr.mxu0 0.0
    %472 = vmatpush1.xpose.msra.mxu0 %v467
    %473 = vmatprep.subr.mxu0 0.0
    %474 = vmatpush1.xpose.msra.mxu0 0.0
    %475 = vmatprep.subr.mxu0 0.0
    %476 = vmatpush1.xpose.msra.mxu0 0.0
    %477 = vmatprep.subr.mxu0 0.0
    %478 = vmatpush1.xpose.msra.mxu0 0.0
    %479 = vmatprep.subr.mxu0 0.0
    %480 = vmatpush1.xpose.msra.mxu0 0.0
    %481 = vmatprep.subr.mxu0 0.0
    %482 = vmatpush1.xpose.msra.mxu0 0.0
    %483 = vmatprep.subr.mxu0 0.0
    %484 = vmatpush1.xpose.msra.mxu0 0.0
    %485 = vmatprep.subr.mxu0 0.0
    %486 = vmatpush1.xpose.msra.mxu0 0.0
    %487 = vmatprep.subr.mxu0 0.0
    %488 = vmatpush1.xpose.msra.mxu0 0.0
    %489 = vmatprep.subr.mxu0 0.0
    %490 = vmatpush1.xpose.msra.mxu0 0.0
    %491 = vmatprep.subr.mxu0 0.0
    %492 = vmatpush1.xpose.msra.mxu0 0.0
    %493 = vmatprep.subr.mxu0 0.0
    %494 = vmatpush1.xpose.msra.mxu0 0.0
    %495 = vmatprep.subr.mxu0 0.0
    %496 = vmatpush1.xpose.msra.mxu0 0.0
    %497 = vmatprep.subr.mxu0 0.0
    %498 = vmatpush1.xpose.msra.mxu0 0.0
    %499 = vmatprep.subr.mxu0 0.0
    %500 = vmatpush1.xpose.msra.mxu0 0.0
    %501 = vmatprep.subr.mxu0 0.0
    %502 = vmatpush1.xpose.msra.mxu0 0.0
    %503 = vmatprep.subr.mxu0 0.0
    %504 = vmatpush1.xpose.msra.mxu0 0.0
    %505 = vmatprep.subr.mxu0 0.0
    %506 = vmatpush1.xpose.msra.mxu0 0.0
    %507 = vmatprep.subr.mxu0 0.0
    %508 = vmatpush1.xpose.msra.mxu0 0.0
    %509 = vmatprep.subr.mxu0 0.0
    %510 = vmatpush1.xpose.msra.mxu0 0.0
    %511 = vmatprep.subr.mxu0 0.0
    %512 = vmatpush1.xpose.msra.mxu0 0.0
    %513 = vmatprep.subr.mxu0 0.0
    %514 = vmatpush1.xpose.msra.mxu0 0.0
    %515 = vmatprep.subr.mxu0 0.0
    %516 = vmatpush1.xpose.msra.mxu0 0.0
    %517 = vmatprep.subr.mxu0 0.0
    %518 = vmatpush1.xpose.msra.mxu0 0.0
    %519 = vmatprep.subr.mxu0 0.0
    %520 = vmatpush1.xpose.msra.mxu0 0.0
    %521 = vmatprep.subr.mxu0 0.0
    %522 = vmatpush1.xpose.msra.mxu0 0.0
    %523 = vmatprep.subr.mxu0 0.0
    %524 = vmatpush1.xpose.msra.mxu0 0.0
    %525 = vmatprep.subr.mxu0 0.0
    %526 = vmatpush1.xpose.msra.mxu0 0.0
    %527 = vmatprep.subr.mxu0 0.0
    %528 = vmatpush1.xpose.msra.mxu0 0.0
    %529 = vmatprep.subr.mxu0 0.0
    %530 = vmatpush1.xpose.msra.mxu0 0.0
    %531 = vmatprep.subr.mxu0 0.0
    %532 = vmatpush1.xpose.msra.mxu0 0.0
    %533 = vmatprep.mubr.f32.mxu0 0.0
    %534 = vmatmul.mubr.f32.gmra.mrb[0].mxu0 %v463
    %v535 = vpop.f32.mrb[0].mxu0
    %v536 = vadd.f32 0.0, %v535
    %v537 = vpop.f32.mrb[0].mxu0
    %538 = vdwg.mxu0
    %v539 = vsel %vm368, %v536, -inf
    %540 = vmax.xlane.f32.xlu0 %v539
    %v541 = vpop.xlane.xlu0 %540
    %v542 = vsub.f32 %v536, %v541
    %v543 = vmul.f32 %v542, 1.442695
    %v544 = vpow.pop %v543
    %v545 = vsel %vm368, %v544, 0.0
    %546 = vadd.xlane.f32.xlu0 %v545
    %v547 = vpop.xlane.xlu0 %546
    %549 = vrot.lane.b32.xlu0 %v280, 120
    %v550 = vpop.permute.xlu0 %549
    %551 = vrot.lane.b32.xlu0 %v285, 120
    %v552 = vpop.permute.xlu0 %551
    %v555 = vsel %vm368, %v544, 0
    %v557 = vsel %vm381, %v552, 0
    %559 = vmatprep.subr.mxu0 0.0
    %560 = vmatpush1.msra.mxu0 %v550
    %561 = vmatprep.subr.mxu0 0.0
    %562 = vmatpush1.msra.mxu0 %v557
    %563 = vmatprep.subr.mxu0 0.0
    %564 = vmatpush1.msra.mxu0 0.0
    %565 = vmatprep.subr.mxu0 0.0
    %566 = vmatpush1.msra.mxu0 0.0
    %567 = vmatprep.subr.mxu0 0.0
    %568 = vmatpush1.msra.mxu0 0.0
    %569 = vmatprep.subr.mxu0 0.0
    %570 = vmatpush1.msra.mxu0 0.0
    %571 = vmatprep.subr.mxu0 0.0
    %572 = vmatpush1.msra.mxu0 0.0
    %573 = vmatprep.subr.mxu0 0.0
    %574 = vmatpush1.msra.mxu0 0.0
    %575 = vmatprep.subr.mxu0 0.0
    %576 = vmatpush1.msra.mxu0 0.0
    %577 = vmatprep.subr.mxu0 0.0
    %578 = vmatpush1.msra.mxu0 0.0
    %579 = vmatprep.subr.mxu0 0.0
    %580 = vmatpush1.msra.mxu0 0.0
    %581 = vmatprep.subr.mxu0 0.0
    %582 = vmatpush1.msra.mxu0 0.0
    %583 = vmatprep.subr.mxu0 0.0
    %584 = vmatpush1.msra.mxu0 0.0
    %585 = vmatprep.subr.mxu0 0.0
    %586 = vmatpush1.msra.mxu0 0.0
    %587 = vmatprep.subr.mxu0 0.0
    %588 = vmatpush1.msra.mxu0 0.0
    %589 = vmatprep.subr.mxu0 0.0
    %590 = vmatpush1.msra.mxu0 0.0
    %591 = vmatprep.subr.mxu0 0.0
    %592 = vmatpush1.msra.mxu0 0.0
    %593 = vmatprep.subr.mxu0 0.0
    %594 = vmatpush1.msra.mxu0 0.0
    %595 = vmatprep.subr.mxu0 0.0
    %596 = vmatpush1.msra.mxu0 0.0
    %597 = vmatprep.subr.mxu0 0.0
    %598 = vmatpush1.msra.mxu0 0.0
    %599 = vmatprep.subr.mxu0 0.0
    %600 = vmatpush1.msra.mxu0 0.0
    %601 = vmatprep.subr.mxu0 0.0
    %602 = vmatpush1.msra.mxu0 0.0
    %603 = vmatprep.subr.mxu0 0.0
    %604 = vmatpush1.msra.mxu0 0.0
    %605 = vmatprep.subr.mxu0 0.0
    %606 = vmatpush1.msra.mxu0 0.0
    %607 = vmatprep.subr.mxu0 0.0
    %608 = vmatpush1.msra.mxu0 0.0
    %609 = vmatprep.subr.mxu0 0.0
    %610 = vmatpush1.msra.mxu0 0.0
    %611 = vmatprep.subr.mxu0 0.0
    %612 = vmatpush1.msra.mxu0 0.0
    %613 = vmatprep.subr.mxu0 0.0
    %614 = vmatpush1.msra.mxu0 0.0
    %615 = vmatprep.subr.mxu0 0.0
    %616 = vmatpush1.msra.mxu0 0.0
    %617 = vmatprep.subr.mxu0 0.0
    %618 = vmatpush1.msra.mxu0 0.0
    %619 = vmatprep.subr.mxu0 0.0
    %620 = vmatpush1.msra.mxu0 0.0
    %621 = vmatprep.subr.mxu0 0.0
    %622 = vmatpush1.msra.mxu0 0.0
    %623 = vmatprep.mubr.f32.mxu0 0.0
    %624 = vmatmul.mubr.f32.gmra.mrb[0].mxu0 %v555
    %v625 = vpop.f32.mrb[0].mxu0
    %v626 = vadd.f32 0.0, %v625
    %v627 = vpop.f32.mrb[0].mxu0
    %628 = vdwg.mxu0
    %v629 = vrcp.pop %v547
    %v630 = vmul.f32 %v626, %v629
    %631 = vrot.lane.b32.xlu0 %v204, 112
    %v632 = vpop.permute.xlu0 %631
    %633 = vrot.lane.b32.xlu0 %v126, 112
    %v634 = vpop.permute.xlu0 %633
    %635 = vrot.lane.b32.xlu0 %v131, 112
    %v636 = vpop.permute.xlu0 %635
    %v637 = vsel %vm288, %v632, 0
    %v639 = vsel %vm288, %v634, 0
    %v641 = vsel %vm288, %v636, 0
    %643 = vmatprep.subr.mxu0 0.0
    %644 = vmatpush1.xpose.msra.mxu0 %v639
    %645 = vmatprep.subr.mxu0 0.0
    %646 = vmatpush1.xpose.msra.mxu0 %v641
    %647 = vmatprep.subr.mxu0 0.0
    %648 = vmatpush1.xpose.msra.mxu0 0.0
    %649 = vmatprep.subr.mxu0 0.0
    %650 = vmatpush1.xpose.msra.mxu0 0.0
    %651 = vmatprep.subr.mxu0 0.0
    %652 = vmatpush1.xpose.msra.mxu0 0.0
    %653 = vmatprep.subr.mxu0 0.0
    %654 = vmatpush1.xpose.msra.mxu0 0.0
    %655 = vmatprep.subr.mxu0 0.0
    %656 = vmatpush1.xpose.msra.mxu0 0.0
    %657 = vmatprep.subr.mxu0 0.0
    %658 = vmatpush1.xpose.msra.mxu0 0.0
    %659 = vmatprep.subr.mxu0 0.0
    %660 = vmatpush1.xpose.msra.mxu0 0.0
    %661 = vmatprep.subr.mxu0 0.0
    %662 = vmatpush1.xpose.msra.mxu0 0.0
    %663 = vmatprep.subr.mxu0 0.0
    %664 = vmatpush1.xpose.msra.mxu0 0.0
    %665 = vmatprep.subr.mxu0 0.0
    %666 = vmatpush1.xpose.msra.mxu0 0.0
    %667 = vmatprep.subr.mxu0 0.0
    %668 = vmatpush1.xpose.msra.mxu0 0.0
    %669 = vmatprep.subr.mxu0 0.0
    %670 = vmatpush1.xpose.msra.mxu0 0.0
    %671 = vmatprep.subr.mxu0 0.0
    %672 = vmatpush1.xpose.msra.mxu0 0.0
    %673 = vmatprep.subr.mxu0 0.0
    %674 = vmatpush1.xpose.msra.mxu0 0.0
    %675 = vmatprep.subr.mxu0 0.0
    %676 = vmatpush1.xpose.msra.mxu0 0.0
    %677 = vmatprep.subr.mxu0 0.0
    %678 = vmatpush1.xpose.msra.mxu0 0.0
    %679 = vmatprep.subr.mxu0 0.0
    %680 = vmatpush1.xpose.msra.mxu0 0.0
    %681 = vmatprep.subr.mxu0 0.0
    %682 = vmatpush1.xpose.msra.mxu0 0.0
    %683 = vmatprep.subr.mxu0 0.0
    %684 = vmatpush1.xpose.msra.mxu0 0.0
    %685 = vmatprep.subr.mxu0 0.0
    %686 = vmatpush1.xpose.msra.mxu0 0.0
    %687 = vmatprep.subr.mxu0 0.0
    %688 = vmatpush1.xpose.msra.mxu0 0.0
    %689 = vmatprep.subr.mxu0 0.0
    %690 = vmatpush1.xpose.msra.mxu0 0.0
    %691 = vmatprep.subr.mxu0 0.0
    %692 = vmatpush1.xpose.msra.mxu0 0.0
    %693 = vmatprep.subr.mxu0 0.0
    %694 = vmatpush1.xpose.msra.mxu0 0.0
    %695 = vmatprep.subr.mxu0 0.0
    %696 = vmatpush1.xpose.msra.mxu0 0.0
    %697 = vmatprep.subr.mxu0 0.0
    %698 = vmatpush1.xpose.msra.mxu0 0.0
    %699 = vmatprep.subr.mxu0 0.0
    %700 = vmatpush1.xpose.msra.mxu0 0.0
    %701 = vmatprep.subr.mxu0 0.0
    %702 = vmatpush1.xpose.msra.mxu0 0.0
    %703 = vmatprep.subr.mxu0 0.0
    %704 = vmatpush1.xpose.msra.mxu0 0.0
    %705 = vmatprep.subr.mxu0 0.0
    %706 = vmatpush1.xpose.msra.mxu0 0.0
    %707 = vmatprep.mubr.f32.mxu0 0.0
    %708 = vmatmul.mubr.f32.gmra.mrb[0].mxu0 %v637
    %v709 = vpop.f32.mrb[0].mxu0
    %v710 = vadd.f32 0.0, %v709
    %v711 = vpop.f32.mrb[0].mxu0
    %712 = vdwg.mxu0
    %v713 = vsel %vm368, %v710, -inf
    %714 = vmax.xlane.f32.xlu0 %v713
    %v715 = vpop.xlane.xlu0 %714
    %v716 = vsub.f32 %v710, %v715
    %v717 = vmul.f32 %v716, 1.442695
    %v718 = vpow.pop %v717
    %v719 = vsel %vm368, %v718, 0.0
    %720 = vadd.xlane.f32.xlu0 %v719
    %v721 = vpop.xlane.xlu0 %720
    %722 = vrot.lane.b32.xlu0 %v280, 112
    %v723 = vpop.permute.xlu0 %722
    %724 = vrot.lane.b32.xlu0 %v285, 112
    %v725 = vpop.permute.xlu0 %724
    %v728 = vsel %vm368, %v718, 0
    %v730 = vsel %vm381, %v725, 0
    %732 = vmatprep.subr.mxu0 0.0
    %733 = vmatpush1.msra.mxu0 %v723
    %734 = vmatprep.subr.mxu0 0.0
    %735 = vmatpush1.msra.mxu0 %v730
    %736 = vmatprep.subr.mxu0 0.0
    %737 = vmatpush1.msra.mxu0 0.0
    %738 = vmatprep.subr.mxu0 0.0
    %739 = vmatpush1.msra.mxu0 0.0
    %740 = vmatprep.subr.mxu0 0.0
    %741 = vmatpush1.msra.mxu0 0.0
    %742 = vmatprep.subr.mxu0 0.0
    %743 = vmatpush1.msra.mxu0 0.0
    %744 = vmatprep.subr.mxu0 0.0
    %745 = vmatpush1.msra.mxu0 0.0
    %746 = vmatprep.subr.mxu0 0.0
    %747 = vmatpush1.msra.mxu0 0.0
    %748 = vmatprep.subr.mxu0 0.0
    %749 = vmatpush1.msra.mxu0 0.0
    %750 = vmatprep.subr.mxu0 0.0
    %751 = vmatpush1.msra.mxu0 0.0
    %752 = vmatprep.subr.mxu0 0.0
    %753 = vmatpush1.msra.mxu0 0.0
    %754 = vmatprep.subr.mxu0 0.0
    %755 = vmatpush1.msra.mxu0 0.0
    %756 = vmatprep.subr.mxu0 0.0
    %757 = vmatpush1.msra.mxu0 0.0
    %758 = vmatprep.subr.mxu0 0.0
    %759 = vmatpush1.msra.mxu0 0.0
    %760 = vmatprep.subr.mxu0 0.0
    %761 = vmatpush1.msra.mxu0 0.0
    %762 = vmatprep.subr.mxu0 0.0
    %763 = vmatpush1.msra.mxu0 0.0
    %764 = vmatprep.subr.mxu0 0.0
    %765 = vmatpush1.msra.mxu0 0.0
    %766 = vmatprep.subr.mxu0 0.0
    %767 = vmatpush1.msra.mxu0 0.0
    %768 = vmatprep.subr.mxu0 0.0
    %769 = vmatpush1.msra.mxu0 0.0
    %770 = vmatprep.subr.mxu0 0.0
    %771 = vmatpush1.msra.mxu0 0.0
    %772 = vmatprep.subr.mxu0 0.0
    %773 = vmatpush1.msra.mxu0 0.0
    %774 = vmatprep.subr.mxu0 0.0
    %775 = vmatpush1.msra.mxu0 0.0
    %776 = vmatprep.subr.mxu0 0.0
    %777 = vmatpush1.msra.mxu0 0.0
    %778 = vmatprep.subr.mxu0 0.0
    %779 = vmatpush1.msra.mxu0 0.0
    %780 = vmatprep.subr.mxu0 0.0
    %781 = vmatpush1.msra.mxu0 0.0
    %782 = vmatprep.subr.mxu0 0.0
    %783 = vmatpush1.msra.mxu0 0.0
    %784 = vmatprep.subr.mxu0 0.0
    %785 = vmatpush1.msra.mxu0 0.0
    %786 = vmatprep.subr.mxu0 0.0
    %787 = vmatpush1.msra.mxu0 0.0
    %788 = vmatprep.subr.mxu0 0.0
    %789 = vmatpush1.msra.mxu0 0.0
    %790 = vmatprep.subr.mxu0 0.0
    %791 = vmatpush1.msra.mxu0 0.0
    %792 = vmatprep.subr.mxu0 0.0
    %793 = vmatpush1.msra.mxu0 0.0
    %794 = vmatprep.subr.mxu0 0.0
    %795 = vmatpush1.msra.mxu0 0.0
    %796 = vmatprep.mubr.f32.mxu0 0.0
    %797 = vmatmul.mubr.f32.gmra.mrb[0].mxu0 %v728
    %v798 = vpop.f32.mrb[0].mxu0
    %v799 = vadd.f32 0.0, %v798
    %v800 = vpop.f32.mrb[0].mxu0
    %801 = vdwg.mxu0
    %v802 = vrcp.pop %v721
    %v803 = vmul.f32 %v799, %v802
    %804 = vrot.lane.b32.xlu0 %v204, 104
    %v805 = vpop.permute.xlu0 %804
    %806 = vrot.lane.b32.xlu0 %v126, 104
    %v807 = vpop.permute.xlu0 %806
    %808 = vrot.lane.b32.xlu0 %v131, 104
    %v809 = vpop.permute.xlu0 %808
    %v810 = vsel %vm288, %v805, 0
    %v812 = vsel %vm288, %v807, 0
    %v814 = vsel %vm288, %v809, 0
    %816 = vmatprep.subr.mxu0 0.0
    %817 = vmatpush1.xpose.msra.mxu0 %v812
    %818 = vmatprep.subr.mxu0 0.0
    %819 = vmatpush1.xpose.msra.mxu0 %v814
    %820 = vmatprep.subr.mxu0 0.0
    %821 = vmatpush1.xpose.msra.mxu0 0.0
    %822 = vmatprep.subr.mxu0 0.0
    %823 = vmatpush1.xpose.msra.mxu0 0.0
    %824 = vmatprep.subr.mxu0 0.0
    %825 = vmatpush1.xpose.msra.mxu0 0.0
    %826 = vmatprep.subr.mxu0 0.0
    %827 = vmatpush1.xpose.msra.mxu0 0.0
    %828 = vmatprep.subr.mxu0 0.0
    %829 = vmatpush1.xpose.msra.mxu0 0.0
    %830 = vmatprep.subr.mxu0 0.0
    %831 = vmatpush1.xpose.msra.mxu0 0.0
    %832 = vmatprep.subr.mxu0 0.0
    %833 = vmatpush1.xpose.msra.mxu0 0.0
    %834 = vmatprep.subr.mxu0 0.0
    %835 = vmatpush1.xpose.msra.mxu0 0.0
    %836 = vmatprep.subr.mxu0 0.0
    %837 = vmatpush1.xpose.msra.mxu0 0.0
    %838 = vmatprep.subr.mxu0 0.0
    %839 = vmatpush1.xpose.msra.mxu0 0.0
    %840 = vmatprep.subr.mxu0 0.0
    %841 = vmatpush1.xpose.msra.mxu0 0.0
    %842 = vmatprep.subr.mxu0 0.0
    %843 = vmatpush1.xpose.msra.mxu0 0.0
    %844 = vmatprep.subr.mxu0 0.0
    %845 = vmatpush1.xpose.msra.mxu0 0.0
    %846 = vmatprep.subr.mxu0 0.0
    %847 = vmatpush1.xpose.msra.mxu0 0.0
    %848 = vmatprep.subr.mxu0 0.0
    %849 = vmatpush1.xpose.msra.mxu0 0.0
    %850 = vmatprep.subr.mxu0 0.0
    %851 = vmatpush1.xpose.msra.mxu0 0.0
    %852 = vmatprep.subr.mxu0 0.0
    %853 = vmatpush1.xpose.msra.mxu0 0.0
    %854 = vmatprep.subr.mxu0 0.0
    %855 = vmatpush1.xpose.msra.mxu0 0.0
    %856 = vmatprep.subr.mxu0 0.0
    %857 = vmatpush1.xpose.msra.mxu0 0.0
    %858 = vmatprep.subr.mxu0 0.0
    %859 = vmatpush1.xpose.msra.mxu0 0.0
    %860 = vmatprep.subr.mxu0 0.0
    %861 = vmatpush1.xpose.msra.mxu0 0.0
    %862 = vmatprep.subr.mxu0 0.0
    %863 = vmatpush1.xpose.msra.mxu0 0.0
    %864 = vmatprep.subr.mxu0 0.0
    %865 = vmatpush1.xpose.msra.mxu0 0.0
    %866 = vmatprep.subr.mxu0 0.0
    %867 = vmatpush1.xpose.msra.mxu0 0.0
    %868 = vmatprep.subr.mxu0 0.0
    %869 = vmatpush1.xpose.msra.mxu0 0.0
    %870 = vmatprep.subr.mxu0 0.0
    %871 = vmatpush1.xpose.msra.mxu0 0.0
    %872 = vmatprep.subr.mxu0 0.0
    %873 = vmatpush1.xpose.msra.mxu0 0.0
    %874 = vmatprep.subr.mxu0 0.0
    %875 = vmatpush1.xpose.msra.mxu0 0.0
    %876 = vmatprep.subr.mxu0 0.0
    %877 = vmatpush1.xpose.msra.mxu0 0.0
    %878 = vmatprep.subr.mxu0 0.0
    %879 = vmatpush1.xpose.msra.mxu0 0.0
    %880 = vmatprep.mubr.f32.mxu0 0.0
    %881 = vmatmul.mubr.f32.gmra.mrb[0].mxu0 %v810
    %v882 = vpop.f32.mrb[0].mxu0
    %v883 = vadd.f32 0.0, %v882
    %v884 = vpop.f32.mrb[0].mxu0
    %885 = vdwg.mxu0
    %v886 = vsel %vm368, %v883, -inf
    %887 = vmax.xlane.f32.xlu0 %v886
    %v888 = vpop.xlane.xlu0 %887
    %v889 = vsub.f32 %v883, %v888
    %v890 = vmul.f32 %v889, 1.442695
    %v891 = vpow.pop %v890
    %v892 = vsel %vm368, %v891, 0.0
    %893 = vadd.xlane.f32.xlu0 %v892
    %v894 = vpop.xlane.xlu0 %893
    %895 = vrot.lane.b32.xlu0 %v280, 104
    %v896 = vpop.permute.xlu0 %895
    %897 = vrot.lane.b32.xlu0 %v285, 104
    %v898 = vpop.permute.xlu0 %897
    %v901 = vsel %vm368, %v891, 0
    %v903 = vsel %vm381, %v898, 0
    %905 = vmatprep.subr.mxu0 0.0
    %906 = vmatpush1.msra.mxu0 %v896
    %907 = vmatprep.subr.mxu0 0.0
    %908 = vmatpush1.msra.mxu0 %v903
    %909 = vmatprep.subr.mxu0 0.0
    %910 = vmatpush1.msra.mxu0 0.0
    %911 = vmatprep.subr.mxu0 0.0
    %912 = vmatpush1.msra.mxu0 0.0
    %913 = vmatprep.subr.mxu0 0.0
    %914 = vmatpush1.msra.mxu0 0.0
    %915 = vmatprep.subr.mxu0 0.0
    %916 = vmatpush1.msra.mxu0 0.0
    %917 = vmatprep.subr.mxu0 0.0
    %918 = vmatpush1.msra.mxu0 0.0
    %919 = vmatprep.subr.mxu0 0.0
    %920 = vmatpush1.msra.mxu0 0.0
    %921 = vmatprep.subr.mxu0 0.0
    %922 = vmatpush1.msra.mxu0 0.0
    %923 = vmatprep.subr.mxu0 0.0
    %924 = vmatpush1.msra.mxu0 0.0
    %925 = vmatprep.subr.mxu0 0.0
    %926 = vmatpush1.msra.mxu0 0.0
    %927 = vmatprep.subr.mxu0 0.0
    %928 = vmatpush1.msra.mxu0 0.0
    %929 = vmatprep.subr.mxu0 0.0
    %930 = vmatpush1.msra.mxu0 0.0
    %931 = vmatprep.subr.mxu0 0.0
    %932 = vmatpush1.msra.mxu0 0.0
    %933 = vmatprep.subr.mxu0 0.0
    %934 = vmatpush1.msra.mxu0 0.0
    %935 = vmatprep.subr.mxu0 0.0
    %936 = vmatpush1.msra.mxu0 0.0
    %937 = vmatprep.subr.mxu0 0.0
    %938 = vmatpush1.msra.mxu0 0.0
    %939 = vmatprep.subr.mxu0 0.0
    %940 = vmatpush1.msra.mxu0 0.0
    %941 = vmatprep.subr.mxu0 0.0
    %942 = vmatpush1.msra.mxu0 0.0
    %943 = vmatprep.subr.mxu0 0.0
    %944 = vmatpush1.msra.mxu0 0.0
    %945 = vmatprep.subr.mxu0 0.0
    %946 = vmatpush1.msra.mxu0 0.0
    %947 = vmatprep.subr.mxu0 0.0
    %948 = vmatpush1.msra.mxu0 0.0
    %949 = vmatprep.subr.mxu0 0.0
    %950 = vmatpush1.msra.mxu0 0.0
    %951 = vmatprep.subr.mxu0 0.0
    %952 = vmatpush1.msra.mxu0 0.0
    %953 = vmatprep.subr.mxu0 0.0
    %954 = vmatpush1.msra.mxu0 0.0
    %955 = vmatprep.subr.mxu0 0.0
    %956 = vmatpush1.msra.mxu0 0.0
    %957 = vmatprep.subr.mxu0 0.0
    %958 = vmatpush1.msra.mxu0 0.0
    %959 = vmatprep.subr.mxu0 0.0
    %960 = vmatpush1.msra.mxu0 0.0
    %961 = vmatprep.subr.mxu0 0.0
    %962 = vmatpush1.msra.mxu0 0.0
    %963 = vmatprep.subr.mxu0 0.0
    %964 = vmatpush1.msra.mxu0 0.0
    %965 = vmatprep.subr.mxu0 0.0
    %966 = vmatpush1.msra.mxu0 0.0
    %967 = vmatprep.subr.mxu0 0.0
    %968 = vmatpush1.msra.mxu0 0.0
    %969 = vmatprep.mubr.f32.mxu0 0.0
    %970 = vmatmul.mubr.f32.gmra.mrb[0].mxu0 %v901
    %v971 = vpop.f32.mrb[0].mxu0
    %v972 = vadd.f32 0.0, %v971
    %v973 = vpop.f32.mrb[0].mxu0
    %974 = vdwg.mxu0
    %v975 = vrcp.pop %v894
    %v976 = vmul.f32 %v972, %v975
    %978 = vrot.lane.b32.xlu0 %v630, 8
    %v979 = vpop.permute.xlu0 %978
    %982 = vrot.lane.b32.xlu0 %v803, 16
    %v983 = vpop.permute.xlu0 %982
    %986 = vrot.lane.b32.xlu0 %v976, 24
    %v987 = vpop.permute.xlu0 %986
    %v989 = vsel %vm288, %v456, %v979
    %vm990 = vcmask 130048
    %v991 = vsel %vm990, %v989, %v983
    %vm992 = vcmask 195584
    %v993 = vsel %vm992, %v991, %v987
    %v995 = vlaneseq
    %v996 = vshrl.u32 %v995, 7
    %v997 = vsub.s32 0, %v996
    %v998 = vrot.slane %v46, %v997
    %v1001 = vsel %vm52, %v993, 0
    %1003 = vmatprep.subr.mxu0 0.0
    %1004 = vmatpush1.msra.mxu0 %v42
    %1005 = vmatprep.subr.mxu0 0.0
    %1006 = vmatpush1.msra.mxu0 %v43
    %1007 = vmatprep.subr.mxu0 0.0
    %1008 = vmatpush1.msra.mxu0 %v44
    %1009 = vmatprep.subr.mxu0 0.0
    %1010 = vmatpush1.msra.mxu0 %v45
    %1011 = vmatprep.subr.mxu0 0.0
    %1012 = vmatpush1.msra.mxu0 0.0
    %1013 = vmatprep.subr.mxu0 0.0
    %1014 = vmatpush1.msra.mxu0 0.0
    %1015 = vmatprep.subr.mxu0 0.0
    %1016 = vmatpush1.msra.mxu0 0.0
    %1017 = vmatprep.subr.mxu0 0.0
    %1018 = vmatpush1.msra.mxu0 0.0
    %1019 = vmatprep.subr.mxu0 0.0
    %1020 = vmatpush1.msra.mxu0 0.0
    %1021 = vmatprep.subr.mxu0 0.0
    %1022 = vmatpush1.msra.mxu0 0.0
    %1023 = vmatprep.subr.mxu0 0.0
    %1024 = vmatpush1.msra.mxu0 0.0
    %1025 = vmatprep.subr.mxu0 0.0
    %1026 = vmatpush1.msra.mxu0 0.0
    %1027 = vmatprep.subr.mxu0 0.0
    %1028 = vmatpush1.msra.mxu0 0.0
    %1029 = vmatprep.subr.mxu0 0.0
    %1030 = vmatpush1.msra.mxu0 0.0
    %1031 = vmatprep.subr.mxu0 0.0
    %1032 = vmatpush1.msra.mxu0 0.0
    %1033 = vmatprep.subr.mxu0 0.0
    %1034 = vmatpush1.msra.mxu0 0.0
    %1035 = vmatprep.subr.mxu0 0.0
    %1036 = vmatpush1.msra.mxu0 0.0
    %1037 = vmatprep.subr.mxu0 0.0
    %1038 = vmatpush1.msra.mxu0 0.0
    %1039 = vmatprep.subr.mxu0 0.0
    %1040 = vmatpush1.msra.mxu0 0.0
    %1041 = vmatprep.subr.mxu0 0.0
    %1042 = vmatpush1.msra.mxu0 0.0
    %1043 = vmatprep.subr.mxu0 0.0
    %1044 = vmatpush1.msra.mxu0 0.0
    %1045 = vmatprep.subr.mxu0 0.0
    %1046 = vmatpush1.msra.mxu0 0.0
    %1047 = vmatprep.subr.mxu0 0.0
    %1048 = vmatpush1.msra.mxu0 0.0
    %1049 = vmatprep.subr.mxu0 0.0
    %1050 = vmatpush1.msra.mxu0 0.0
    %1051 = vmatprep.subr.mxu0 0.0
    %1052 = vmatpush1.msra.mxu0 0.0
    %1053 = vmatprep.subr.mxu0 0.0
    %1054 = vmatpush1.msra.mxu0 0.0
    %1055 = vmatprep.subr.mxu0 0.0
    %1056 = vmatpush1.msra.mxu0 0.0
    %1057 = vmatprep.subr.mxu0 0.0
    %1058 = vmatpush1.msra.mxu0 0.0
    %1059 = vmatprep.subr.mxu0 0.0
    %1060 = vmatpush1.msra.mxu0 0.0
    %1061 = vmatprep.subr.mxu0 0.0
    %1062 = vmatpush1.msra.mxu0 0.0
    %1063 = vmatprep.subr.mxu0 0.0
    %1064 = vmatpush1.msra.mxu0 0.0
    %1065 = vmatprep.subr.mxu0 0.0
    %1066 = vmatpush1.msra.mxu0 0.0
    %1067 = vmatprep.mubr.f32.mxu0 0.0
    %1068 = vmatmul.mubr.f32.gmra.mrb[0].mxu0 %v1001
    %v1069 = vpop.f32.mrb[0].mxu0
    %v1070 = vadd.f32 %v998, %v1069
    %v1071 = vpop.f32.mrb[0].mxu0
    %1072 = vdwg.mxu0
    %1073 = vst.msk [vmem:[#allocation2] sm:$0xff] %vm990, %v1070
    %s1074 = scalar_lea.vmem %s0, 16
    %v1075 = vld [vmem:[%s1074] sm:$0xff]
    %v1076 = vld [vmem:[%s1074 + $0x8] sm:$0xf]
    %s1077 = scalar_lea.vmem %s1, 8
    %v1078 = vld [vmem:[%s1077] sm:$0xff]
    %s1079 = scalar_lea.vmem %s2, 16
    %v1080 = vld [vmem:[%s1079] sm:$0xff]
    %v1081 = vld [vmem:[%s1079 + $0x8] sm:$0xf]
    %v1083 = vsel %vm52, %v1075, 0
    %v1086 = vsel %vm52, %v1076, 0
    %1088 = vmatprep.subr.mxu0 0.0
    %1089 = vmatpush1.msra.mxu0 %v30
    %1090 = vmatprep.subr.mxu0 0.0
    %1091 = vmatpush1.msra.mxu0 %v31
    %1092 = vmatprep.subr.mxu0 0.0
    %1093 = vmatpush1.msra.mxu0 %v32
    %1094 = vmatprep.subr.mxu0 0.0
    %1095 = vmatpush1.msra.mxu0 %v33
    %1096 = vmatprep.subr.mxu0 0.0
    %1097 = vmatpush1.msra.mxu0 0.0
    %1098 = vmatprep.subr.mxu0 0.0
    %1099 = vmatpush1.msra.mxu0 0.0
    %1100 = vmatprep.subr.mxu0 0.0
    %1101 = vmatpush1.msra.mxu0 0.0
    %1102 = vmatprep.subr.mxu0 0.0
    %1103 = vmatpush1.msra.mxu0 0.0
    %1104 = vmatprep.subr.mxu0 0.0
    %1105 = vmatpush1.msra.mxu0 0.0
    %1106 = vmatprep.subr.mxu0 0.0
    %1107 = vmatpush1.msra.mxu0 0.0
    %1108 = vmatprep.subr.mxu0 0.0
    %1109 = vmatpush1.msra.mxu0 0.0
    %1110 = vmatprep.subr.mxu0 0.0
    %1111 = vmatpush1.msra.mxu0 0.0
    %1112 = vmatprep.subr.mxu0 0.0
    %1113 = vmatpush1.msra.mxu0 0.0
    %1114 = vmatprep.subr.mxu0 0.0
    %1115 = vmatpush1.msra.mxu0 0.0
    %1116 = vmatprep.subr.mxu0 0.0
    %1117 = vmatpush1.msra.mxu0 0.0
    %1118 = vmatprep.subr.mxu0 0.0
    %1119 = vmatpush1.msra.mxu0 0.0
    %1120 = vmatprep.subr.mxu0 0.0
    %1121 = vmatpush1.msra.mxu0 0.0
    %1122 = vmatprep.subr.mxu0 0.0
    %1123 = vmatpush1.msra.mxu0 0.0
    %1124 = vmatprep.subr.mxu0 0.0
    %1125 = vmatpush1.msra.mxu0 0.0
    %1126 = vmatprep.subr.mxu0 0.0
    %1127 = vmatpush1.msra.mxu0 0.0
    %1128 = vmatprep.subr.mxu0 0.0
    %1129 = vmatpush1.msra.mxu0 0.0
    %1130 = vmatprep.subr.mxu0 0.0
    %1131 = vmatpush1.msra.mxu0 0.0
    %1132 = vmatprep.subr.mxu0 0.0
    %1133 = vmatpush1.msra.mxu0 0.0
    %1134 = vmatprep.subr.mxu0 0.0
    %1135 = vmatpush1.msra.mxu0 0.0
    %1136 = vmatprep.subr.mxu0 0.0
    %1137 = vmatpush1.msra.mxu0 0.0
    %1138 = vmatprep.subr.mxu0 0.0
    %1139 = vmatpush1.msra.mxu0 0.0
    %1140 = vmatprep.subr.mxu0 0.0
    %1141 = vmatpush1.msra.mxu0 0.0
    %1142 = vmatprep.subr.mxu0 0.0
    %1143 = vmatpush1.msra.mxu0 0.0
    %1144 = vmatprep.subr.mxu0 0.0
    %1145 = vmatpush1.msra.mxu0 0.0
    %1146 = vmatprep.subr.mxu0 0.0
    %1147 = vmatpush1.msra.mxu0 0.0
    %1148 = vmatprep.subr.mxu0 0.0
    %1149 = vmatpush1.msra.mxu0 0.0
    %1150 = vmatprep.subr.mxu0 0.0
    %1151 = vmatpush1.msra.mxu0 0.0
    %1152 = vmatprep.mubr.f32.mxu0 0.0
    %1153 = vmatmul.mubr.f32.gmra.mrb[0].mxu0 %v1083
    %v1154 = vpop.f32.mrb[0].mxu0
    %v1155 = vadd.f32 0.0, %v1154
    %v1156 = vpop.f32.mrb[0].mxu0
    %1157 = vmatprep.mubr.f32.mxu0 0.0
    %1158 = vmatmul.mubr.f32.gmra.mrb[0].mxu0 %v1086
    %v1159 = vpop.f32.mrb[0].mxu0
    %v1160 = vadd.f32 0.0, %v1159
    %v1161 = vpop.f32.mrb[0].mxu0
    %1162 = vdwg.mxu0
    %v1164 = vsel %vm52, %v1078, 0
    %1166 = vmatprep.subr.mxu0 0.0
    %1167 = vmatpush1.msra.mxu0 %v34
    %1168 = vmatprep.subr.mxu0 0.0
    %1169 = vmatpush1.msra.mxu0 %v35
    %1170 = vmatprep.subr.mxu0 0.0
    %1171 = vmatpush1.msra.mxu0 %v36
    %1172 = vmatprep.subr.mxu0 0.0
    %1173 = vmatpush1.msra.mxu0 %v37
    %1174 = vmatprep.subr.mxu0 0.0
    %1175 = vmatpush1.msra.mxu0 0.0
    %1176 = vmatprep.subr.mxu0 0.0
    %1177 = vmatpush1.msra.mxu0 0.0
    %1178 = vmatprep.subr.mxu0 0.0
    %1179 = vmatpush1.msra.mxu0 0.0
    %1180 = vmatprep.subr.mxu0 0.0
    %1181 = vmatpush1.msra.mxu0 0.0
    %1182 = vmatprep.subr.mxu0 0.0
    %1183 = vmatpush1.msra.mxu0 0.0
    %1184 = vmatprep.subr.mxu0 0.0
    %1185 = vmatpush1.msra.mxu0 0.0
    %1186 = vmatprep.subr.mxu0 0.0
    %1187 = vmatpush1.msra.mxu0 0.0
    %1188 = vmatprep.subr.mxu0 0.0
    %1189 = vmatpush1.msra.mxu0 0.0
    %1190 = vmatprep.subr.mxu0 0.0
    %1191 = vmatpush1.msra.mxu0 0.0
    %1192 = vmatprep.subr.mxu0 0.0
    %1193 = vmatpush1.msra.mxu0 0.0
    %1194 = vmatprep.subr.mxu0 0.0
    %1195 = vmatpush1.msra.mxu0 0.0
    %1196 = vmatprep.subr.mxu0 0.0
    %1197 = vmatpush1.msra.mxu0 0.0
    %1198 = vmatprep.subr.mxu0 0.0
    %1199 = vmatpush1.msra.mxu0 0.0
    %1200 = vmatprep.subr.mxu0 0.0
    %1201 = vmatpush1.msra.mxu0 0.0
    %1202 = vmatprep.subr.mxu0 0.0
    %1203 = vmatpush1.msra.mxu0 0.0
    %1204 = vmatprep.subr.mxu0 0.0
    %1205 = vmatpush1.msra.mxu0 0.0
    %1206 = vmatprep.subr.mxu0 0.0
    %1207 = vmatpush1.msra.mxu0 0.0
    %1208 = vmatprep.subr.mxu0 0.0
    %1209 = vmatpush1.msra.mxu0 0.0
    %1210 = vmatprep.subr.mxu0 0.0
    %1211 = vmatpush1.msra.mxu0 0.0
    %1212 = vmatprep.subr.mxu0 0.0
    %1213 = vmatpush1.msra.mxu0 0.0
    %1214 = vmatprep.subr.mxu0 0.0
    %1215 = vmatpush1.msra.mxu0 0.0
    %1216 = vmatprep.subr.mxu0 0.0
    %1217 = vmatpush1.msra.mxu0 0.0
    %1218 = vmatprep.subr.mxu0 0.0
    %1219 = vmatpush1.msra.mxu0 0.0
    %1220 = vmatprep.subr.mxu0 0.0
    %1221 = vmatpush1.msra.mxu0 0.0
    %1222 = vmatprep.subr.mxu0 0.0
    %1223 = vmatpush1.msra.mxu0 0.0
    %1224 = vmatprep.subr.mxu0 0.0
    %1225 = vmatpush1.msra.mxu0 0.0
    %1226 = vmatprep.subr.mxu0 0.0
    %1227 = vmatpush1.msra.mxu0 0.0
    %1228 = vmatprep.subr.mxu0 0.0
    %1229 = vmatpush1.msra.mxu0 0.0
    %1230 = vmatprep.mubr.f32.mxu0 0.0
    %1231 = vmatmul.mubr.f32.gmra.mrb[0].mxu0 %v1164
    %v1232 = vpop.f32.mrb[0].mxu0
    %v1233 = vadd.f32 0.0, %v1232
    %v1234 = vpop.f32.mrb[0].mxu0
    %1235 = vdwg.mxu0
    %v1237 = vsel %vm52, %v1080, 0
    %v1240 = vsel %vm52, %v1081, 0
    %1242 = vmatprep.subr.mxu0 0.0
    %1243 = vmatpush1.msra.mxu0 %v38
    %1244 = vmatprep.subr.mxu0 0.0
    %1245 = vmatpush1.msra.mxu0 %v39
    %1246 = vmatprep.subr.mxu0 0.0
    %1247 = vmatpush1.msra.mxu0 %v40
    %1248 = vmatprep.subr.mxu0 0.0
    %1249 = vmatpush1.msra.mxu0 %v41
    %1250 = vmatprep.subr.mxu0 0.0
    %1251 = vmatpush1.msra.mxu0 0.0
    %1252 = vmatprep.subr.mxu0 0.0
    %1253 = vmatpush1.msra.mxu0 0.0
    %1254 = vmatprep.subr.mxu0 0.0
    %1255 = vmatpush1.msra.mxu0 0.0
    %1256 = vmatprep.subr.mxu0 0.0
    %1257 = vmatpush1.msra.mxu0 0.0
    %1258 = vmatprep.subr.mxu0 0.0
    %1259 = vmatpush1.msra.mxu0 0.0
    %1260 = vmatprep.subr.mxu0 0.0
    %1261 = vmatpush1.msra.mxu0 0.0
    %1262 = vmatprep.subr.mxu0 0.0
    %1263 = vmatpush1.msra.mxu0 0.0
    %1264 = vmatprep.subr.mxu0 0.0
    %1265 = vmatpush1.msra.mxu0 0.0
    %1266 = vmatprep.subr.mxu0 0.0
    %1267 = vmatpush1.msra.mxu0 0.0
    %1268 = vmatprep.subr.mxu0 0.0
    %1269 = vmatpush1.msra.mxu0 0.0
    %1270 = vmatprep.subr.mxu0 0.0
    %1271 = vmatpush1.msra.mxu0 0.0
    %1272 = vmatprep.subr.mxu0 0.0
    %1273 = vmatpush1.msra.mxu0 0.0
    %1274 = vmatprep.subr.mxu0 0.0
    %1275 = vmatpush1.msra.mxu0 0.0
    %1276 = vmatprep.subr.mxu0 0.0
    %1277 = vmatpush1.msra.mxu0 0.0
    %1278 = vmatprep.subr.mxu0 0.0
    %1279 = vmatpush1.msra.mxu0 0.0
    %1280 = vmatprep.subr.mxu0 0.0
    %1281 = vmatpush1.msra.mxu0 0.0
    %1282 = vmatprep.subr.mxu0 0.0
    %1283 = vmatpush1.msra.mxu0 0.0
    %1284 = vmatprep.subr.mxu0 0.0
    %1285 = vmatpush1.msra.mxu0 0.0
    %1286 = vmatprep.subr.mxu0 0.0
    %1287 = vmatpush1.msra.mxu0 0.0
    %1288 = vmatprep.subr.mxu0 0.0
    %1289 = vmatpush1.msra.mxu0 0.0
    %1290 = vmatprep.subr.mxu0 0.0
    %1291 = vmatpush1.msra.mxu0 0.0
    %1292 = vmatprep.subr.mxu0 0.0
    %1293 = vmatpush1.msra.mxu0 0.0
    %1294 = vmatprep.subr.mxu0 0.0
    %1295 = vmatpush1.msra.mxu0 0.0
    %1296 = vmatprep.subr.mxu0 0.0
    %1297 = vmatpush1.msra.mxu0 0.0
    %1298 = vmatprep.subr.mxu0 0.0
    %1299 = vmatpush1.msra.mxu0 0.0
    %1300 = vmatprep.subr.mxu0 0.0
    %1301 = vmatpush1.msra.mxu0 0.0
    %1302 = vmatprep.subr.mxu0 0.0
    %1303 = vmatpush1.msra.mxu0 0.0
    %1304 = vmatprep.subr.mxu0 0.0
    %1305 = vmatpush1.msra.mxu0 0.0
    %1306 = vmatprep.mubr.f32.mxu0 0.0
    %1307 = vmatmul.mubr.f32.gmra.mrb[0].mxu0 %v1237
    %v1308 = vpop.f32.mrb[0].mxu0
    %v1309 = vadd.f32 0.0, %v1308
    %v1310 = vpop.f32.mrb[0].mxu0
    %1311 = vmatprep.mubr.f32.mxu0 0.0
    %1312 = vmatmul.mubr.f32.gmra.mrb[0].mxu0 %v1240
    %v1313 = vpop.f32.mrb[0].mxu0
    %v1314 = vadd.f32 0.0, %v1313
    %v1315 = vpop.f32.mrb[0].mxu0
    %1316 = vdwg.mxu0
    %v1318 = vsel %vm288, %v1233, 0
    %v1321 = vsel %vm288, %v1155, 0
    %v1324 = vsel %vm288, %v1160, 0
    %1326 = vmatprep.subr.mxu0 0.0
    %1327 = vmatpush1.xpose.msra.mxu0 %v1321
    %1328 = vmatprep.subr.mxu0 0.0
    %1329 = vmatpush1.xpose.msra.mxu0 %v1324
    %1330 = vmatprep.subr.mxu0 0.0
    %1331 = vmatpush1.xpose.msra.mxu0 0.0
    %1332 = vmatprep.subr.mxu0 0.0
    %1333 = vmatpush1.xpose.msra.mxu0 0.0
    %1334 = vmatprep.subr.mxu0 0.0
    %1335 = vmatpush1.xpose.msra.mxu0 0.0
    %1336 = vmatprep.subr.mxu0 0.0
    %1337 = vmatpush1.xpose.msra.mxu0 0.0
    %1338 = vmatprep.subr.mxu0 0.0
    %1339 = vmatpush1.xpose.msra.mxu0 0.0
    %1340 = vmatprep.subr.mxu0 0.0
    %1341 = vmatpush1.xpose.msra.mxu0 0.0
    %1342 = vmatprep.subr.mxu0 0.0
    %1343 = vmatpush1.xpose.msra.mxu0 0.0
    %1344 = vmatprep.subr.mxu0 0.0
    %1345 = vmatpush1.xpose.msra.mxu0 0.0
    %1346 = vmatprep.subr.mxu0 0.0
    %1347 = vmatpush1.xpose.msra.mxu0 0.0
    %1348 = vmatprep.subr.mxu0 0.0
    %1349 = vmatpush1.xpose.msra.mxu0 0.0
    %1350 = vmatprep.subr.mxu0 0.0
    %1351 = vmatpush1.xpose.msra.mxu0 0.0
    %1352 = vmatprep.subr.mxu0 0.0
    %1353 = vmatpush1.xpose.msra.mxu0 0.0
    %1354 = vmatprep.subr.mxu0 0.0
    %1355 = vmatpush1.xpose.msra.mxu0 0.0
    %1356 = vmatprep.subr.mxu0 0.0
    %1357 = vmatpush1.xpose.msra.mxu0 0.0
    %1358 = vmatprep.subr.mxu0 0.0
    %1359 = vmatpush1.xpose.msra.mxu0 0.0
    %1360 = vmatprep.subr.mxu0 0.0
    %1361 = vmatpush1.xpose.msra.mxu0 0.0
    %1362 = vmatprep.subr.mxu0 0.0
    %1363 = vmatpush1.xpose.msra.mxu0 0.0
    %1364 = vmatprep.subr.mxu0 0.0
    %1365 = vmatpush1.xpose.msra.mxu0 0.0
    %1366 = vmatprep.subr.mxu0 0.0
    %1367 = vmatpush1.xpose.msra.mxu0 0.0
    %1368 = vmatprep.subr.mxu0 0.0
    %1369 = vmatpush1.xpose.msra.mxu0 0.0
    %1370 = vmatprep.subr.mxu0 0.0
    %1371 = vmatpush1.xpose.msra.mxu0 0.0
    %1372 = vmatprep.subr.mxu0 0.0
    %1373 = vmatpush1.xpose.msra.mxu0 0.0
    %1374 = vmatprep.subr.mxu0 0.0
    %1375 = vmatpush1.xpose.msra.mxu0 0.0
    %1376 = vmatprep.subr.mxu0 0.0
    %1377 = vmatpush1.xpose.msra.mxu0 0.0
    %1378 = vmatprep.subr.mxu0 0.0
    %1379 = vmatpush1.xpose.msra.mxu0 0.0
    %1380 = vmatprep.subr.mxu0 0.0
    %1381 = vmatpush1.xpose.msra.mxu0 0.0
    %1382 = vmatprep.subr.mxu0 0.0
    %1383 = vmatpush1.xpose.msra.mxu0 0.0
    %1384 = vmatprep.subr.mxu0 0.0
    %1385 = vmatpush1.xpose.msra.mxu0 0.0
    %1386 = vmatprep.subr.mxu0 0.0
    %1387 = vmatpush1.xpose.msra.mxu0 0.0
    %1388 = vmatprep.subr.mxu0 0.0
    %1389 = vmatpush1.xpose.msra.mxu0 0.0
    %1390 = vmatprep.mubr.f32.mxu0 0.0
    %1391 = vmatmul.mubr.f32.gmra.mrb[0].mxu0 %v1318
    %v1392 = vpop.f32.mrb[0].mxu0
    %v1393 = vadd.f32 0.0, %v1392
    %v1394 = vpop.f32.mrb[0].mxu0
    %1395 = vdwg.mxu0
    %v1396 = vsel %vm368, %v1393, -inf
    %1397 = vmax.xlane.f32.xlu0 %v1396
    %v1398 = vpop.xlane.xlu0 %1397
    %v1399 = vsub.f32 %v1393, %v1398
    %v1400 = vmul.f32 %v1399, 1.442695
    %v1401 = vpow.pop %v1400
    %v1402 = vsel %vm368, %v1401, 0.0
    %1403 = vadd.xlane.f32.xlu0 %v1402
    %v1404 = vpop.xlane.xlu0 %1403
    %v1406 = vsel %vm368, %v1401, 0
    %v1409 = vsel %vm381, %v1314, 0
    %1411 = vmatprep.subr.mxu0 0.0
    %1412 = vmatpush1.msra.mxu0 %v1309
    %1413 = vmatprep.subr.mxu0 0.0
    %1414 = vmatpush1.msra.mxu0 %v1409
    %1415 = vmatprep.subr.mxu0 0.0
    %1416 = vmatpush1.msra.mxu0 0.0
    %1417 = vmatprep.subr.mxu0 0.0
    %1418 = vmatpush1.msra.mxu0 0.0
    %1419 = vmatprep.subr.mxu0 0.0
    %1420 = vmatpush1.msra.mxu0 0.0
    %1421 = vmatprep.subr.mxu0 0.0
    %1422 = vmatpush1.msra.mxu0 0.0
    %1423 = vmatprep.subr.mxu0 0.0
    %1424 = vmatpush1.msra.mxu0 0.0
    %1425 = vmatprep.subr.mxu0 0.0
    %1426 = vmatpush1.msra.mxu0 0.0
    %1427 = vmatprep.subr.mxu0 0.0
    %1428 = vmatpush1.msra.mxu0 0.0
    %1429 = vmatprep.subr.mxu0 0.0
    %1430 = vmatpush1.msra.mxu0 0.0
    %1431 = vmatprep.subr.mxu0 0.0
    %1432 = vmatpush1.msra.mxu0 0.0
    %1433 = vmatprep.subr.mxu0 0.0
    %1434 = vmatpush1.msra.mxu0 0.0
    %1435 = vmatprep.subr.mxu0 0.0
    %1436 = vmatpush1.msra.mxu0 0.0
    %1437 = vmatprep.subr.mxu0 0.0
    %1438 = vmatpush1.msra.mxu0 0.0
    %1439 = vmatprep.subr.mxu0 0.0
    %1440 = vmatpush1.msra.mxu0 0.0
    %1441 = vmatprep.subr.mxu0 0.0
    %1442 = vmatpush1.msra.mxu0 0.0
    %1443 = vmatprep.subr.mxu0 0.0
    %1444 = vmatpush1.msra.mxu0 0.0
    %1445 = vmatprep.subr.mxu0 0.0
    %1446 = vmatpush1.msra.mxu0 0.0
    %1447 = vmatprep.subr.mxu0 0.0
    %1448 = vmatpush1.msra.mxu0 0.0
    %1449 = vmatprep.subr.mxu0 0.0
    %1450 = vmatpush1.msra.mxu0 0.0
    %1451 = vmatprep.subr.mxu0 0.0
    %1452 = vmatpush1.msra.mxu0 0.0
    %1453 = vmatprep.subr.mxu0 0.0
    %1454 = vmatpush1.msra.mxu0 0.0
    %1455 = vmatprep.subr.mxu0 0.0
    %1456 = vmatpush1.msra.mxu0 0.0
    %1457 = vmatprep.subr.mxu0 0.0
    %1458 = vmatpush1.msra.mxu0 0.0
    %1459 = vmatprep.subr.mxu0 0.0
    %1460 = vmatpush1.msra.mxu0 0.0
    %1461 = vmatprep.subr.mxu0 0.0
    %1462 = vmatpush1.msra.mxu0 0.0
    %1463 = vmatprep.subr.mxu0 0.0
    %1464 = vmatpush1.msra.mxu0 0.0
    %1465 = vmatprep.subr.mxu0 0.0
    %1466 = vmatpush1.msra.mxu0 0.0
    %1467 = vmatprep.subr.mxu0 0.0
    %1468 = vmatpush1.msra.mxu0 0.0
    %1469 = vmatprep.subr.mxu0 0.0
    %1470 = vmatpush1.msra.mxu0 0.0
    %1471 = vmatprep.subr.mxu0 0.0
    %1472 = vmatpush1.msra.mxu0 0.0
    %1473 = vmatprep.subr.mxu0 0.0
    %1474 = vmatpush1.msra.mxu0 0.0
    %1475 = vmatprep.mubr.f32.mxu0 0.0
    %1476 = vmatmul.mubr.f32.gmra.mrb[0].mxu0 %v1406
    %v1477 = vpop.f32.mrb[0].mxu0
    %v1478 = vadd.f32 0.0, %v1477
    %v1479 = vpop.f32.mrb[0].mxu0
    %1480 = vdwg.mxu0
    %v1481 = vrcp.pop %v1404
    %v1482 = vmul.f32 %v1478, %v1481
    %1483 = vrot.lane.b32.xlu0 %v1233, 120
    %v1484 = vpop.permute.xlu0 %1483
    %1485 = vrot.lane.b32.xlu0 %v1155, 120
    %v1486 = vpop.permute.xlu0 %1485
    %1487 = vrot.lane.b32.xlu0 %v1160, 120
    %v1488 = vpop.permute.xlu0 %1487
    %v1489 = vsel %vm288, %v1484, 0
    %v1491 = vsel %vm288, %v1486, 0
    %v1493 = vsel %vm288, %v1488, 0
    %1495 = vmatprep.subr.mxu0 0.0
    %1496 = vmatpush1.xpose.msra.mxu0 %v1491
    %1497 = vmatprep.subr.mxu0 0.0
    %1498 = vmatpush1.xpose.msra.mxu0 %v1493
    %1499 = vmatprep.subr.mxu0 0.0
    %1500 = vmatpush1.xpose.msra.mxu0 0.0
    %1501 = vmatprep.subr.mxu0 0.0
    %1502 = vmatpush1.xpose.msra.mxu0 0.0
    %1503 = vmatprep.subr.mxu0 0.0
    %1504 = vmatpush1.xpose.msra.mxu0 0.0
    %1505 = vmatprep.subr.mxu0 0.0
    %1506 = vmatpush1.xpose.msra.mxu0 0.0
    %1507 = vmatprep.subr.mxu0 0.0
    %1508 = vmatpush1.xpose.msra.mxu0 0.0
    %1509 = vmatprep.subr.mxu0 0.0
    %1510 = vmatpush1.xpose.msra.mxu0 0.0
    %1511 = vmatprep.subr.mxu0 0.0
    %1512 = vmatpush1.xpose.msra.mxu0 0.0
    %1513 = vmatprep.subr.mxu0 0.0
    %1514 = vmatpush1.xpose.msra.mxu0 0.0
    %1515 = vmatprep.subr.mxu0 0.0
    %1516 = vmatpush1.xpose.msra.mxu0 0.0
    %1517 = vmatprep.subr.mxu0 0.0
    %1518 = vmatpush1.xpose.msra.mxu0 0.0
    %1519 = vmatprep.subr.mxu0 0.0
    %1520 = vmatpush1.xpose.msra.mxu0 0.0
    %1521 = vmatprep.subr.mxu0 0.0
    %1522 = vmatpush1.xpose.msra.mxu0 0.0
    %1523 = vmatprep.subr.mxu0 0.0
    %1524 = vmatpush1.xpose.msra.mxu0 0.0
    %1525 = vmatprep.subr.mxu0 0.0
    %1526 = vmatpush1.xpose.msra.mxu0 0.0
    %1527 = vmatprep.subr.mxu0 0.0
    %1528 = vmatpush1.xpose.msra.mxu0 0.0
    %1529 = vmatprep.subr.mxu0 0.0
    %1530 = vmatpush1.xpose.msra.mxu0 0.0
    %1531 = vmatprep.subr.mxu0 0.0
    %1532 = vmatpush1.xpose.msra.mxu0 0.0
    %1533 = vmatprep.subr.mxu0 0.0
    %1534 = vmatpush1.xpose.msra.mxu0 0.0
    %1535 = vmatprep.subr.mxu0 0.0
    %1536 = vmatpush1.xpose.msra.mxu0 0.0
    %1537 = vmatprep.subr.mxu0 0.0
    %1538 = vmatpush1.xpose.msra.mxu0 0.0
    %1539 = vmatprep.subr.mxu0 0.0
    %1540 = vmatpush1.xpose.msra.mxu0 0.0
    %1541 = vmatprep.subr.mxu0 0.0
    %1542 = vmatpush1.xpose.msra.mxu0 0.0
    %1543 = vmatprep.subr.mxu0 0.0
    %1544 = vmatpush1.xpose.msra.mxu0 0.0
    %1545 = vmatprep.subr.mxu0 0.0
    %1546 = vmatpush1.xpose.msra.mxu0 0.0
    %1547 = vmatprep.subr.mxu0 0.0
    %1548 = vmatpush1.xpose.msra.mxu0 0.0
    %1549 = vmatprep.subr.mxu0 0.0
    %1550 = vmatpush1.xpose.msra.mxu0 0.0
    %1551 = vmatprep.subr.mxu0 0.0
    %1552 = vmatpush1.xpose.msra.mxu0 0.0
    %1553 = vmatprep.subr.mxu0 0.0
    %1554 = vmatpush1.xpose.msra.mxu0 0.0
    %1555 = vmatprep.subr.mxu0 0.0
    %1556 = vmatpush1.xpose.msra.mxu0 0.0
    %1557 = vmatprep.subr.mxu0 0.0
    %1558 = vmatpush1.xpose.msra.mxu0 0.0
    %1559 = vmatprep.mubr.f32.mxu0 0.0
    %1560 = vmatmul.mubr.f32.gmra.mrb[0].mxu0 %v1489
    %v1561 = vpop.f32.mrb[0].mxu0
    %v1562 = vadd.f32 0.0, %v1561
    %v1563 = vpop.f32.mrb[0].mxu0
    %1564 = vdwg.mxu0
    %v1565 = vsel %vm368, %v1562, -inf
    %1566 = vmax.xlane.f32.xlu0 %v1565
    %v1567 = vpop.xlane.xlu0 %1566
    %v1568 = vsub.f32 %v1562, %v1567
    %v1569 = vmul.f32 %v1568, 1.442695
    %v1570 = vpow.pop %v1569
    %v1571 = vsel %vm368, %v1570, 0.0
    %1572 = vadd.xlane.f32.xlu0 %v1571
    %v1573 = vpop.xlane.xlu0 %1572
    %1575 = vrot.lane.b32.xlu0 %v1309, 120
    %v1576 = vpop.permute.xlu0 %1575
    %1577 = vrot.lane.b32.xlu0 %v1314, 120
    %v1578 = vpop.permute.xlu0 %1577
    %v1581 = vsel %vm368, %v1570, 0
    %v1583 = vsel %vm381, %v1578, 0
    %1585 = vmatprep.subr.mxu0 0.0
    %1586 = vmatpush1.msra.mxu0 %v1576
    %1587 = vmatprep.subr.mxu0 0.0
    %1588 = vmatpush1.msra.mxu0 %v1583
    %1589 = vmatprep.subr.mxu0 0.0
    %1590 = vmatpush1.msra.mxu0 0.0
    %1591 = vmatprep.subr.mxu0 0.0
    %1592 = vmatpush1.msra.mxu0 0.0
    %1593 = vmatprep.subr.mxu0 0.0
    %1594 = vmatpush1.msra.mxu0 0.0
    %1595 = vmatprep.subr.mxu0 0.0
    %1596 = vmatpush1.msra.mxu0 0.0
    %1597 = vmatprep.subr.mxu0 0.0
    %1598 = vmatpush1.msra.mxu0 0.0
    %1599 = vmatprep.subr.mxu0 0.0
    %1600 = vmatpush1.msra.mxu0 0.0
    %1601 = vmatprep.subr.mxu0 0.0
    %1602 = vmatpush1.msra.mxu0 0.0
    %1603 = vmatprep.subr.mxu0 0.0
    %1604 = vmatpush1.msra.mxu0 0.0
    %1605 = vmatprep.subr.mxu0 0.0
    %1606 = vmatpush1.msra.mxu0 0.0
    %1607 = vmatprep.subr.mxu0 0.0
    %1608 = vmatpush1.msra.mxu0 0.0
    %1609 = vmatprep.subr.mxu0 0.0
    %1610 = vmatpush1.msra.mxu0 0.0
    %1611 = vmatprep.subr.mxu0 0.0
    %1612 = vmatpush1.msra.mxu0 0.0
    %1613 = vmatprep.subr.mxu0 0.0
    %1614 = vmatpush1.msra.mxu0 0.0
    %1615 = vmatprep.subr.mxu0 0.0
    %1616 = vmatpush1.msra.mxu0 0.0
    %1617 = vmatprep.subr.mxu0 0.0
    %1618 = vmatpush1.msra.mxu0 0.0
    %1619 = vmatprep.subr.mxu0 0.0
    %1620 = vmatpush1.msra.mxu0 0.0
    %1621 = vmatprep.subr.mxu0 0.0
    %1622 = vmatpush1.msra.mxu0 0.0
    %1623 = vmatprep.subr.mxu0 0.0
    %1624 = vmatpush1.msra.mxu0 0.0
    %1625 = vmatprep.subr.mxu0 0.0
    %1626 = vmatpush1.msra.mxu0 0.0
    %1627 = vmatprep.subr.mxu0 0.0
    %1628 = vmatpush1.msra.mxu0 0.0
    %1629 = vmatprep.subr.mxu0 0.0
    %1630 = vmatpush1.msra.mxu0 0.0
    %1631 = vmatprep.subr.mxu0 0.0
    %1632 = vmatpush1.msra.mxu0 0.0
    %1633 = vmatprep.subr.mxu0 0.0
    %1634 = vmatpush1.msra.mxu0 0.0
    %1635 = vmatprep.subr.mxu0 0.0
    %1636 = vmatpush1.msra.mxu0 0.0
    %1637 = vmatprep.subr.mxu0 0.0
    %1638 = vmatpush1.msra.mxu0 0.0
    %1639 = vmatprep.subr.mxu0 0.0
    %1640 = vmatpush1.msra.mxu0 0.0
    %1641 = vmatprep.subr.mxu0 0.0
    %1642 = vmatpush1.msra.mxu0 0.0
    %1643 = vmatprep.subr.mxu0 0.0
    %1644 = vmatpush1.msra.mxu0 0.0
    %1645 = vmatprep.subr.mxu0 0.0
    %1646 = vmatpush1.msra.mxu0 0.0
    %1647 = vmatprep.subr.mxu0 0.0
    %1648 = vmatpush1.msra.mxu0 0.0
    %1649 = vmatprep.mubr.f32.mxu0 0.0
    %1650 = vmatmul.mubr.f32.gmra.mrb[0].mxu0 %v1581
    %v1651 = vpop.f32.mrb[0].mxu0
    %v1652 = vadd.f32 0.0, %v1651
    %v1653 = vpop.f32.mrb[0].mxu0
    %1654 = vdwg.mxu0
    %v1655 = vrcp.pop %v1573
    %v1656 = vmul.f32 %v1652, %v1655
    %1657 = vrot.lane.b32.xlu0 %v1233, 112
    %v1658 = vpop.permute.xlu0 %1657
    %1659 = vrot.lane.b32.xlu0 %v1155, 112
    %v1660 = vpop.permute.xlu0 %1659
    %1661 = vrot.lane.b32.xlu0 %v1160, 112
    %v1662 = vpop.permute.xlu0 %1661
    %v1663 = vsel %vm288, %v1658, 0
    %v1665 = vsel %vm288, %v1660, 0
    %v1667 = vsel %vm288, %v1662, 0
    %1669 = vmatprep.subr.mxu0 0.0
    %1670 = vmatpush1.xpose.msra.mxu0 %v1665
    %1671 = vmatprep.subr.mxu0 0.0
    %1672 = vmatpush1.xpose.msra.mxu0 %v1667
    %1673 = vmatprep.subr.mxu0 0.0
    %1674 = vmatpush1.xpose.msra.mxu0 0.0
    %1675 = vmatprep.subr.mxu0 0.0
    %1676 = vmatpush1.xpose.msra.mxu0 0.0
    %1677 = vmatprep.subr.mxu0 0.0
    %1678 = vmatpush1.xpose.msra.mxu0 0.0
    %1679 = vmatprep.subr.mxu0 0.0
    %1680 = vmatpush1.xpose.msra.mxu0 0.0
    %1681 = vmatprep.subr.mxu0 0.0
    %1682 = vmatpush1.xpose.msra.mxu0 0.0
    %1683 = vmatprep.subr.mxu0 0.0
    %1684 = vmatpush1.xpose.msra.mxu0 0.0
    %1685 = vmatprep.subr.mxu0 0.0
    %1686 = vmatpush1.xpose.msra.mxu0 0.0
    %1687 = vmatprep.subr.mxu0 0.0
    %1688 = vmatpush1.xpose.msra.mxu0 0.0
    %1689 = vmatprep.subr.mxu0 0.0
    %1690 = vmatpush1.xpose.msra.mxu0 0.0
    %1691 = vmatprep.subr.mxu0 0.0
    %1692 = vmatpush1.xpose.msra.mxu0 0.0
    %1693 = vmatprep.subr.mxu0 0.0
    %1694 = vmatpush1.xpose.msra.mxu0 0.0
    %1695 = vmatprep.subr.mxu0 0.0
    %1696 = vmatpush1.xpose.msra.mxu0 0.0
    %1697 = vmatprep.subr.mxu0 0.0
    %1698 = vmatpush1.xpose.msra.mxu0 0.0
    %1699 = vmatprep.subr.mxu0 0.0
    %1700 = vmatpush1.xpose.msra.mxu0 0.0
    %1701 = vmatprep.subr.mxu0 0.0
    %1702 = vmatpush1.xpose.msra.mxu0 0.0
    %1703 = vmatprep.subr.mxu0 0.0
    %1704 = vmatpush1.xpose.msra.mxu0 0.0
    %1705 = vmatprep.subr.mxu0 0.0
    %1706 = vmatpush1.xpose.msra.mxu0 0.0
    %1707 = vmatprep.subr.mxu0 0.0
    %1708 = vmatpush1.xpose.msra.mxu0 0.0
    %1709 = vmatprep.subr.mxu0 0.0
    %1710 = vmatpush1.xpose.msra.mxu0 0.0
    %1711 = vmatprep.subr.mxu0 0.0
    %1712 = vmatpush1.xpose.msra.mxu0 0.0
    %1713 = vmatprep.subr.mxu0 0.0
    %1714 = vmatpush1.xpose.msra.mxu0 0.0
    %1715 = vmatprep.subr.mxu0 0.0
    %1716 = vmatpush1.xpose.msra.mxu0 0.0
    %1717 = vmatprep.subr.mxu0 0.0
    %1718 = vmatpush1.xpose.msra.mxu0 0.0
    %1719 = vmatprep.subr.mxu0 0.0
    %1720 = vmatpush1.xpose.msra.mxu0 0.0
    %1721 = vmatprep.subr.mxu0 0.0
    %1722 = vmatpush1.xpose.msra.mxu0 0.0
    %1723 = vmatprep.subr.mxu0 0.0
    %1724 = vmatpush1.xpose.msra.mxu0 0.0
    %1725 = vmatprep.subr.mxu0 0.0
    %1726 = vmatpush1.xpose.msra.mxu0 0.0
    %1727 = vmatprep.subr.mxu0 0.0
    %1728 = vmatpush1.xpose.msra.mxu0 0.0
    %1729 = vmatprep.subr.mxu0 0.0
    %1730 = vmatpush1.xpose.msra.mxu0 0.0
    %1731 = vmatprep.subr.mxu0 0.0
    %1732 = vmatpush1.xpose.msra.mxu0 0.0
    %1733 = vmatprep.mubr.f32.mxu0 0.0
    %1734 = vmatmul.mubr.f32.gmra.mrb[0].mxu0 %v1663
    %v1735 = vpop.f32.mrb[0].mxu0
    %v1736 = vadd.f32 0.0, %v1735
    %v1737 = vpop.f32.mrb[0].mxu0
    %1738 = vdwg.mxu0
    %v1739 = vsel %vm368, %v1736, -inf
    %1740 = vmax.xlane.f32.xlu0 %v1739
    %v1741 = vpop.xlane.xlu0 %1740
    %v1742 = vsub.f32 %v1736, %v1741
    %v1743 = vmul.f32 %v1742, 1.442695
    %v1744 = vpow.pop %v1743
    %v1745 = vsel %vm368, %v1744, 0.0
    %1746 = vadd.xlane.f32.xlu0 %v1745
    %v1747 = vpop.xlane.xlu0 %1746
    %1748 = vrot.lane.b32.xlu0 %v1309, 112
    %v1749 = vpop.permute.xlu0 %1748
    %1750 = vrot.lane.b32.xlu0 %v1314, 112
    %v1751 = vpop.permute.xlu0 %1750
    %v1754 = vsel %vm368, %v1744, 0
    %v1756 = vsel %vm381, %v1751, 0
    %1758 = vmatprep.subr.mxu0 0.0
    %1759 = vmatpush1.msra.mxu0 %v1749
    %1760 = vmatprep.subr.mxu0 0.0
    %1761 = vmatpush1.msra.mxu0 %v1756
    %1762 = vmatprep.subr.mxu0 0.0
    %1763 = vmatpush1.msra.mxu0 0.0
    %1764 = vmatprep.subr.mxu0 0.0
    %1765 = vmatpush1.msra.mxu0 0.0
    %1766 = vmatprep.subr.mxu0 0.0
    %1767 = vmatpush1.msra.mxu0 0.0
    %1768 = vmatprep.subr.mxu0 0.0
    %1769 = vmatpush1.msra.mxu0 0.0
    %1770 = vmatprep.subr.mxu0 0.0
    %1771 = vmatpush1.msra.mxu0 0.0
    %1772 = vmatprep.subr.mxu0 0.0
    %1773 = vmatpush1.msra.mxu0 0.0
    %1774 = vmatprep.subr.mxu0 0.0
    %1775 = vmatpush1.msra.mxu0 0.0
    %1776 = vmatprep.subr.mxu0 0.0
    %1777 = vmatpush1.msra.mxu0 0.0
    %1778 = vmatprep.subr.mxu0 0.0
    %1779 = vmatpush1.msra.mxu0 0.0
    %1780 = vmatprep.subr.mxu0 0.0
    %1781 = vmatpush1.msra.mxu0 0.0
    %1782 = vmatprep.subr.mxu0 0.0
    %1783 = vmatpush1.msra.mxu0 0.0
    %1784 = vmatprep.subr.mxu0 0.0
    %1785 = vmatpush1.msra.mxu0 0.0
    %1786 = vmatprep.subr.mxu0 0.0
    %1787 = vmatpush1.msra.mxu0 0.0
    %1788 = vmatprep.subr.mxu0 0.0
    %1789 = vmatpush1.msra.mxu0 0.0
    %1790 = vmatprep.subr.mxu0 0.0
    %1791 = vmatpush1.msra.mxu0 0.0
    %1792 = vmatprep.subr.mxu0 0.0
    %1793 = vmatpush1.msra.mxu0 0.0
    %1794 = vmatprep.subr.mxu0 0.0
    %1795 = vmatpush1.msra.mxu0 0.0
    %1796 = vmatprep.subr.mxu0 0.0
    %1797 = vmatpush1.msra.mxu0 0.0
    %1798 = vmatprep.subr.mxu0 0.0
    %1799 = vmatpush1.msra.mxu0 0.0
    %1800 = vmatprep.subr.mxu0 0.0
    %1801 = vmatpush1.msra.mxu0 0.0
    %1802 = vmatprep.subr.mxu0 0.0
    %1803 = vmatpush1.msra.mxu0 0.0
    %1804 = vmatprep.subr.mxu0 0.0
    %1805 = vmatpush1.msra.mxu0 0.0
    %1806 = vmatprep.subr.mxu0 0.0
    %1807 = vmatpush1.msra.mxu0 0.0
    %1808 = vmatprep.subr.mxu0 0.0
    %1809 = vmatpush1.msra.mxu0 0.0
    %1810 = vmatprep.subr.mxu0 0.0
    %1811 = vmatpush1.msra.mxu0 0.0
    %1812 = vmatprep.subr.mxu0 0.0
    %1813 = vmatpush1.msra.mxu0 0.0
    %1814 = vmatprep.subr.mxu0 0.0
    %1815 = vmatpush1.msra.mxu0 0.0
    %1816 = vmatprep.subr.mxu0 0.0
    %1817 = vmatpush1.msra.mxu0 0.0
    %1818 = vmatprep.subr.mxu0 0.0
    %1819 = vmatpush1.msra.mxu0 0.0
    %1820 = vmatprep.subr.mxu0 0.0
    %1821 = vmatpush1.msra.mxu0 0.0
    %1822 = vmatprep.mubr.f32.mxu0 0.0
    %1823 = vmatmul.mubr.f32.gmra.mrb[0].mxu0 %v1754
    %v1824 = vpop.f32.mrb[0].mxu0
    %v1825 = vadd.f32 0.0, %v1824
    %v1826 = vpop.f32.mrb[0].mxu0
    %1827 = vdwg.mxu0
    %v1828 = vrcp.pop %v1747
    %v1829 = vmul.f32 %v1825, %v1828
    %1830 = vrot.lane.b32.xlu0 %v1233, 104
    %v1831 = vpop.permute.xlu0 %1830
    %1832 = vrot.lane.b32.xlu0 %v1155, 104
    %v1833 = vpop.permute.xlu0 %1832
    %1834 = vrot.lane.b32.xlu0 %v1160, 104
    %v1835 = vpop.permute.xlu0 %1834
    %v1836 = vsel %vm288, %v1831, 0
    %v1838 = vsel %vm288, %v1833, 0
    %v1840 = vsel %vm288, %v1835, 0
    %1842 = vmatprep.subr.mxu0 0.0
    %1843 = vmatpush1.xpose.msra.mxu0 %v1838
    %1844 = vmatprep.subr.mxu0 0.0
    %1845 = vmatpush1.xpose.msra.mxu0 %v1840
    %1846 = vmatprep.subr.mxu0 0.0
    %1847 = vmatpush1.xpose.msra.mxu0 0.0
    %1848 = vmatprep.subr.mxu0 0.0
    %1849 = vmatpush1.xpose.msra.mxu0 0.0
    %1850 = vmatprep.subr.mxu0 0.0
    %1851 = vmatpush1.xpose.msra.mxu0 0.0
    %1852 = vmatprep.subr.mxu0 0.0
    %1853 = vmatpush1.xpose.msra.mxu0 0.0
    %1854 = vmatprep.subr.mxu0 0.0
    %1855 = vmatpush1.xpose.msra.mxu0 0.0
    %1856 = vmatprep.subr.mxu0 0.0
    %1857 = vmatpush1.xpose.msra.mxu0 0.0
    %1858 = vmatprep.subr.mxu0 0.0
    %1859 = vmatpush1.xpose.msra.mxu0 0.0
    %1860 = vmatprep.subr.mxu0 0.0
    %1861 = vmatpush1.xpose.msra.mxu0 0.0
    %1862 = vmatprep.subr.mxu0 0.0
    %1863 = vmatpush1.xpose.msra.mxu0 0.0
    %1864 = vmatprep.subr.mxu0 0.0
    %1865 = vmatpush1.xpose.msra.mxu0 0.0
    %1866 = vmatprep.subr.mxu0 0.0
    %1867 = vmatpush1.xpose.msra.mxu0 0.0
    %1868 = vmatprep.subr.mxu0 0.0
    %1869 = vmatpush1.xpose.msra.mxu0 0.0
    %1870 = vmatprep.subr.mxu0 0.0
    %1871 = vmatpush1.xpose.msra.mxu0 0.0
    %1872 = vmatprep.subr.mxu0 0.0
    %1873 = vmatpush1.xpose.msra.mxu0 0.0
    %1874 = vmatprep.subr.mxu0 0.0
    %1875 = vmatpush1.xpose.msra.mxu0 0.0
    %1876 = vmatprep.subr.mxu0 0.0
    %1877 = vmatpush1.xpose.msra.mxu0 0.0
    %1878 = vmatprep.subr.mxu0 0.0
    %1879 = vmatpush1.xpose.msra.mxu0 0.0
    %1880 = vmatprep.subr.mxu0 0.0
    %1881 = vmatpush1.xpose.msra.mxu0 0.0
    %1882 = vmatprep.subr.mxu0 0.0
    %1883 = vmatpush1.xpose.msra.mxu0 0.0
    %1884 = vmatprep.subr.mxu0 0.0
    %1885 = vmatpush1.xpose.msra.mxu0 0.0
    %1886 = vmatprep.subr.mxu0 0.0
    %1887 = vmatpush1.xpose.msra.mxu0 0.0
    %1888 = vmatprep.subr.mxu0 0.0
    %1889 = vmatpush1.xpose.msra.mxu0 0.0
    %1890 = vmatprep.subr.mxu0 0.0
    %1891 = vmatpush1.xpose.msra.mxu0 0.0
    %1892 = vmatprep.subr.mxu0 0.0
    %1893 = vmatpush1.xpose.msra.mxu0 0.0
    %1894 = vmatprep.subr.mxu0 0.0
    %1895 = vmatpush1.xpose.msra.mxu0 0.0
    %1896 = vmatprep.subr.mxu0 0.0
    %1897 = vmatpush1.xpose.msra.mxu0 0.0
    %1898 = vmatprep.subr.mxu0 0.0
    %1899 = vmatpush1.xpose.msra.mxu0 0.0
    %1900 = vmatprep.subr.mxu0 0.0
    %1901 = vmatpush1.xpose.msra.mxu0 0.0
    %1902 = vmatprep.subr.mxu0 0.0
    %1903 = vmatpush1.xpose.msra.mxu0 0.0
    %1904 = vmatprep.subr.mxu0 0.0
    %1905 = vmatpush1.xpose.msra.mxu0 0.0
    %1906 = vmatprep.mubr.f32.mxu0 0.0
    %1907 = vmatmul.mubr.f32.gmra.mrb[0].mxu0 %v1836
    %v1908 = vpop.f32.mrb[0].mxu0
    %v1909 = vadd.f32 0.0, %v1908
    %v1910 = vpop.f32.mrb[0].mxu0
    %1911 = vdwg.mxu0
    %v1912 = vsel %vm368, %v1909, -inf
    %1913 = vmax.xlane.f32.xlu0 %v1912
    %v1914 = vpop.xlane.xlu0 %1913
    %v1915 = vsub.f32 %v1909, %v1914
    %v1916 = vmul.f32 %v1915, 1.442695
    %v1917 = vpow.pop %v1916
    %v1918 = vsel %vm368, %v1917, 0.0
    %1919 = vadd.xlane.f32.xlu0 %v1918
    %v1920 = vpop.xlane.xlu0 %1919
    %1921 = vrot.lane.b32.xlu0 %v1309, 104
    %v1922 = vpop.permute.xlu0 %1921
    %1923 = vrot.lane.b32.xlu0 %v1314, 104
    %v1924 = vpop.permute.xlu0 %1923
    %v1927 = vsel %vm368, %v1917, 0
    %v1929 = vsel %vm381, %v1924, 0
    %1931 = vmatprep.subr.mxu0 0.0
    %1932 = vmatpush1.msra.mxu0 %v1922
    %1933 = vmatprep.subr.mxu0 0.0
    %1934 = vmatpush1.msra.mxu0 %v1929
    %1935 = vmatprep.subr.mxu0 0.0
    %1936 = vmatpush1.msra.mxu0 0.0
    %1937 = vmatprep.subr.mxu0 0.0
    %1938 = vmatpush1.msra.mxu0 0.0
    %1939 = vmatprep.subr.mxu0 0.0
    %1940 = vmatpush1.msra.mxu0 0.0
    %1941 = vmatprep.subr.mxu0 0.0
    %1942 = vmatpush1.msra.mxu0 0.0
    %1943 = vmatprep.subr.mxu0 0.0
    %1944 = vmatpush1.msra.mxu0 0.0
    %1945 = vmatprep.subr.mxu0 0.0
    %1946 = vmatpush1.msra.mxu0 0.0
    %1947 = vmatprep.subr.mxu0 0.0
    %1948 = vmatpush1.msra.mxu0 0.0
    %1949 = vmatprep.subr.mxu0 0.0
    %1950 = vmatpush1.msra.mxu0 0.0
    %1951 = vmatprep.subr.mxu0 0.0
    %1952 = vmatpush1.msra.mxu0 0.0
    %1953 = vmatprep.subr.mxu0 0.0
    %1954 = vmatpush1.msra.mxu0 0.0
    %1955 = vmatprep.subr.mxu0 0.0
    %1956 = vmatpush1.msra.mxu0 0.0
    %1957 = vmatprep.subr.mxu0 0.0
    %1958 = vmatpush1.msra.mxu0 0.0
    %1959 = vmatprep.subr.mxu0 0.0
    %1960 = vmatpush1.msra.mxu0 0.0
    %1961 = vmatprep.subr.mxu0 0.0
    %1962 = vmatpush1.msra.mxu0 0.0
    %1963 = vmatprep.subr.mxu0 0.0
    %1964 = vmatpush1.msra.mxu0 0.0
    %1965 = vmatprep.subr.mxu0 0.0
    %1966 = vmatpush1.msra.mxu0 0.0
    %1967 = vmatprep.subr.mxu0 0.0
    %1968 = vmatpush1.msra.mxu0 0.0
    %1969 = vmatprep.subr.mxu0 0.0
    %1970 = vmatpush1.msra.mxu0 0.0
    %1971 = vmatprep.subr.mxu0 0.0
    %1972 = vmatpush1.msra.mxu0 0.0
    %1973 = vmatprep.subr.mxu0 0.0
    %1974 = vmatpush1.msra.mxu0 0.0
    %1975 = vmatprep.subr.mxu0 0.0
    %1976 = vmatpush1.msra.mxu0 0.0
    %1977 = vmatprep.subr.mxu0 0.0
    %1978 = vmatpush1.msra.mxu0 0.0
    %1979 = vmatprep.subr.mxu0 0.0
    %1980 = vmatpush1.msra.mxu0 0.0
    %1981 = vmatprep.subr.mxu0 0.0
    %1982 = vmatpush1.msra.mxu0 0.0
    %1983 = vmatprep.subr.mxu0 0.0
    %1984 = vmatpush1.msra.mxu0 0.0
    %1985 = vmatprep.subr.mxu0 0.0
    %1986 = vmatpush1.msra.mxu0 0.0
    %1987 = vmatprep.subr.mxu0 0.0
    %1988 = vmatpush1.msra.mxu0 0.0
    %1989 = vmatprep.subr.mxu0 0.0
    %1990 = vmatpush1.msra.mxu0 0.0
    %1991 = vmatprep.subr.mxu0 0.0
    %1992 = vmatpush1.msra.mxu0 0.0
    %1993 = vmatprep.subr.mxu0 0.0
    %1994 = vmatpush1.msra.mxu0 0.0
    %1995 = vmatprep.mubr.f32.mxu0 0.0
    %1996 = vmatmul.mubr.f32.gmra.mrb[0].mxu0 %v1927
    %v1997 = vpop.f32.mrb[0].mxu0
    %v1998 = vadd.f32 0.0, %v1997
    %v1999 = vpop.f32.mrb[0].mxu0
    %2000 = vdwg.mxu0
    %v2001 = vrcp.pop %v1920
    %v2002 = vmul.f32 %v1998, %v2001
    %2004 = vrot.lane.b32.xlu0 %v1656, 8
    %v2005 = vpop.permute.xlu0 %2004
    %2008 = vrot.lane.b32.xlu0 %v1829, 16
    %v2009 = vpop.permute.xlu0 %2008
    %2012 = vrot.lane.b32.xlu0 %v2002, 24
    %v2013 = vpop.permute.xlu0 %2012
    %v2015 = vsel %vm288, %v1482, %v2005
    %v2016 = vsel %vm990, %v2015, %v2009
    %v2017 = vsel %vm992, %v2016, %v2013
    %v2019 = vsel %vm52, %v2017, 0
    %2021 = vmatprep.subr.mxu0 0.0
    %2022 = vmatpush1.msra.mxu0 %v42
    %2023 = vmatprep.subr.mxu0 0.0
    %2024 = vmatpush1.msra.mxu0 %v43
    %2025 = vmatprep.subr.mxu0 0.0
    %2026 = vmatpush1.msra.mxu0 %v44
    %2027 = vmatprep.subr.mxu0 0.0
    %2028 = vmatpush1.msra.mxu0 %v45
    %2029 = vmatprep.subr.mxu0 0.0
    %2030 = vmatpush1.msra.mxu0 0.0
    %2031 = vmatprep.subr.mxu0 0.0
    %2032 = vmatpush1.msra.mxu0 0.0
    %2033 = vmatprep.subr.mxu0 0.0
    %2034 = vmatpush1.msra.mxu0 0.0
    %2035 = vmatprep.subr.mxu0 0.0
    %2036 = vmatpush1.msra.mxu0 0.0
    %2037 = vmatprep.subr.mxu0 0.0
    %2038 = vmatpush1.msra.mxu0 0.0
    %2039 = vmatprep.subr.mxu0 0.0
    %2040 = vmatpush1.msra.mxu0 0.0
    %2041 = vmatprep.subr.mxu0 0.0
    %2042 = vmatpush1.msra.mxu0 0.0
    %2043 = vmatprep.subr.mxu0 0.0
    %2044 = vmatpush1.msra.mxu0 0.0
    %2045 = vmatprep.subr.mxu0 0.0
    %2046 = vmatpush1.msra.mxu0 0.0
    %2047 = vmatprep.subr.mxu0 0.0
    %2048 = vmatpush1.msra.mxu0 0.0
    %2049 = vmatprep.subr.mxu0 0.0
    %2050 = vmatpush1.msra.mxu0 0.0
    %2051 = vmatprep.subr.mxu0 0.0
    %2052 = vmatpush1.msra.mxu0 0.0
    %2053 = vmatprep.subr.mxu0 0.0
    %2054 = vmatpush1.msra.mxu0 0.0
    %2055 = vmatprep.subr.mxu0 0.0
    %2056 = vmatpush1.msra.mxu0 0.0
    %2057 = vmatprep.subr.mxu0 0.0
    %2058 = vmatpush1.msra.mxu0 0.0
    %2059 = vmatprep.subr.mxu0 0.0
    %2060 = vmatpush1.msra.mxu0 0.0
    %2061 = vmatprep.subr.mxu0 0.0
    %2062 = vmatpush1.msra.mxu0 0.0
    %2063 = vmatprep.subr.mxu0 0.0
    %2064 = vmatpush1.msra.mxu0 0.0
    %2065 = vmatprep.subr.mxu0 0.0
    %2066 = vmatpush1.msra.mxu0 0.0
    %2067 = vmatprep.subr.mxu0 0.0
    %2068 = vmatpush1.msra.mxu0 0.0
    %2069 = vmatprep.subr.mxu0 0.0
    %2070 = vmatpush1.msra.mxu0 0.0
    %2071 = vmatprep.subr.mxu0 0.0
    %2072 = vmatpush1.msra.mxu0 0.0
    %2073 = vmatprep.subr.mxu0 0.0
    %2074 = vmatpush1.msra.mxu0 0.0
    %2075 = vmatprep.subr.mxu0 0.0
    %2076 = vmatpush1.msra.mxu0 0.0
    %2077 = vmatprep.subr.mxu0 0.0
    %2078 = vmatpush1.msra.mxu0 0.0
    %2079 = vmatprep.subr.mxu0 0.0
    %2080 = vmatpush1.msra.mxu0 0.0
    %2081 = vmatprep.subr.mxu0 0.0
    %2082 = vmatpush1.msra.mxu0 0.0
    %2083 = vmatprep.subr.mxu0 0.0
    %2084 = vmatpush1.msra.mxu0 0.0
    %2085 = vmatprep.mubr.f32.mxu0 0.0
    %2086 = vmatmul.mubr.f32.gmra.mrb[0].mxu0 %v2019
    %v2087 = vpop.f32.mrb[0].mxu0
    %v2088 = vadd.f32 %v998, %v2087
    %v2089 = vpop.f32.mrb[0].mxu0
    %2090 = vdwg.mxu0
    %s2091 = scalar_lea.vmem [#allocation2], 8
    %2092 = vst.msk [vmem:[%s2091] sm:$0xff] %vm990, %v2088
    // Predicated region
    $region34: #{tpu_custom_call.1} parent=1 // pred_check
      _
    $region35: #{tpu_custom_call.1} parent=1 // pred_check_branch
      %2094 = sbr.rel (0) target = $region37
    $region36: #{tpu_custom_call.1} parent=1 // pred_region
      %s2096 = ssub.s32 256, 256
      %2097 = vsyncadd [#allocation3], %s2096
      %s2098 = sshll.u32 [#allocation2], 4
      %s2099 = int_to_ptr.vmem [resolvable:$true] %s2098
      %2104 = dma.vmem_to_hbm [thread:$0]  %s2099, 256, %s8, [#allocation3], 128, 128, 8
    $region37: #{tpu_custom_call.1} parent=1 // pred_fallthru
      _
    // Predicated region
    $region38: #{tpu_custom_call.1} parent=1 // pred_check
      _
    $region39: #{tpu_custom_call.1} parent=1 // pred_check_branch
      %2106 = sbr.rel (0) target = $region41
    $region40: #{tpu_custom_call.1} parent=1 // pred_region
      %2107 = dma.done [#allocation3], 256
    $region41: #{tpu_custom_call.1} parent=1 // pred_fallthru
      _
    %2108 = vsyncpa [#allocation3], 1

</llo_original>
